<compile_context>
chip_gen: v6e
topology: v6e:2x2x1
jax: 0.10.0
libtpu: 0.0.40
codegen_flags: <defaults>
</compile_context>

<pallas_src>
import functools

import jax
import jax.numpy as jnp
import numpy as np
from jax import lax
from jax.experimental import pallas as pl
from jax.experimental.pallas import tpu as pltpu


def _eresidual_kernel(x_ref, w1_ref, b1_ref, w2_ref, b2_ref, w3_ref, b3_ref,
                      masks_ref, o_ref, xpad_ref, *, width, pad):
    """One grid step = one batch image.

    x_ref   : (1, C, HW) f32   flattened image (conv input AND residual)
    w1/w2   : (9, C, C)  f32   per-tap 3x3 weight slabs, k = (dy+1)*3 + (dx+1)
    w3      : (C, C)     f32   1x1 weights
    b1/b2/b3: (C, 1)     f32
    masks   : (2, HW)    f32   row 0: col>=1 (dx=-1), row 1: col<=W-2 (dx=+1)
    o_ref   : (1, C, HW) f32
    xpad_ref: (C, HW + 2*PAD) f32 VMEM shift buffer, PAD % 128 == 0
    """
    C = x_ref.shape[1]
    HW = x_ref.shape[2]
    W = width
    PAD = pad

    # Zero ONLY the two lane-pad strips; they provide the H-direction zero
    # padding for both 3x3 convs.  The interior is fully rewritten before each
    # conv, so the zero border stays valid between conv1 and conv2.
    xpad_ref[:, 0:PAD] = jnp.zeros((C, PAD), xpad_ref.dtype)
    xpad_ref[:, PAD + HW:PAD + HW + PAD] = jnp.zeros((C, PAD), xpad_ref.dtype)

    mask_l = masks_ref[0:1, :]          # valid where col >= 1   (dx = -1 taps)
    mask_r = masks_ref[1:2, :]          # valid where col <= W-2 (dx = +1 taps)

    def conv3x3(inp, w_ref, b_ref):
        # inp: (C, HW) f32.  One aligned interior write, then 9 accumulating
        # dots on statically shifted views (no im2col strips).  Accumulation is
        # grouped by dx so the column-pad masks apply after the dots.
        xpad_ref[:, PAD:PAD + HW] = inp
        acc = {}
        for dx in (-1, 0, 1):
            a = None
            for dy in (-1, 0, 1):
                k = (dy + 1) * 3 + (dx + 1)
                off = dy * W + dx
                tap = xpad_ref[:, PAD + off:PAD + off + HW]      # static shift
                d = jnp.dot(w_ref[k], tap, preferred_element_type=jnp.float32)
                a = d if a is None else a + d
            acc[dx] = a
        out = acc[-1] * mask_l + acc[0] + acc[1] * mask_r + b_ref[...]
        return jnp.maximum(out, 0.0)                             # (C, HW) f32

    xb = x_ref[0]                                                # (C, HW) f32
    h1 = conv3x3(xb, w1_ref, b1_ref)
    h2 = conv3x3(h1, w2_ref, b2_ref)
    h3 = jnp.dot(w3_ref[...], h2, preferred_element_type=jnp.float32) + b3_ref[...]
    o_ref[0] = jnp.maximum(h3 + xb, 0.0).astype(o_ref.dtype)


def eresidual_block(x_nchw, w1_oihw, b1, w2_oihw, b2, w3_oihw, b3):
    """relu(conv1x1(relu(conv3x3(relu(conv3x3(x))))) + x); NCHW in / NCHW out."""
    N, C, H, W = x_nchw.shape
    HW = H * W
    PAD = ((W + 1 + 127) // 128) * 128   # >= W+1 and lane-aligned

    # Weights: OIHW -> (9, Cout, Cin); slab k = (dy+1)*3 + (dx+1) is w[:,:,dy+1,dx+1].
    w1_9 = jnp.transpose(w1_oihw, (2, 3, 0, 1)).reshape(9, C, C).astype(jnp.float32)
    w2_9 = jnp.transpose(w2_oihw, (2, 3, 0, 1)).reshape(9, C, C).astype(jnp.float32)
    w3m = w3_oihw[:, :, 0, 0].astype(jnp.float32)
    b1c = b1.reshape(C, 1).astype(jnp.float32)
    b2c = b2.reshape(C, 1).astype(jnp.float32)
    b3c = b3.reshape(C, 1).astype(jnp.float32)

    # Grid-invariant column-validity masks (computed once, not per grid step).
    col = jnp.arange(HW, dtype=jnp.int32) % W
    masks = jnp.stack([(col >= 1).astype(jnp.float32),
                       (col <= W - 2).astype(jnp.float32)])      # (2, HW)

    # Flatten spatial onto the 128-lane axis; contiguous-dim merge, no HBM copy
    # and no halo'd band materialization.
    x_flat = x_nchw.reshape(N, C, HW).astype(jnp.float32)

    # Whole image per grid step; check the working set against the smallest
    # per-generation VMEM budget (v7x has only 64 MiB physical / 32 MiB scoped).
    try:
        vmem_cap = pltpu.get_tpu_info().vmem_capacity_bytes
    except Exception:  # pragma: no cover - conservative fallback off-TPU
        vmem_cap = 64 * 1024 * 1024
    budget = min(vmem_cap // 2, 32 * 1024 * 1024)
    footprint = 4 * (C * (4 * HW + HW + 2 * PAD)        # x/out double-buffered + xpad
                     + 2 * (9 * C * C + C * C + 3 * C + 2 * HW))  # params + masks
    # TODO(synk): band over H (manual halo DMA from a pl.ANY input) once a
    # single image no longer fits the VMEM budget; unnecessary at these sizes.
    assert footprint <= budget, "image too large for whole-image-per-step kernel"

    kernel = functools.partial(_eresidual_kernel, width=W, pad=PAD)

    out_flat = pl.pallas_call(
        kernel,
        out_shape=jax.ShapeDtypeStruct((N, C, HW), x_nchw.dtype),
        grid_spec=pltpu.PrefetchScalarGridSpec(
            num_scalar_prefetch=0,
            grid=(N,),
            in_specs=[
                pl.BlockSpec((1, C, HW), lambda n: (n, 0, 0)),   # x (conv in + residual)
                # Grid-invariant weights/biases/masks: same block every step,
                # DMA'd once.  (pl.Buffered(1) would drop their double buffers;
                # negligible at this size, so left at the default.)
                pl.BlockSpec((9, C, C), lambda n: (0, 0, 0)),    # w1 tap slabs
                pl.BlockSpec((C, 1), lambda n: (0, 0)),          # b1
                pl.BlockSpec((9, C, C), lambda n: (0, 0, 0)),    # w2 tap slabs
                pl.BlockSpec((C, 1), lambda n: (0, 0)),          # b2
                pl.BlockSpec((C, C), lambda n: (0, 0)),          # w3 (1x1)
                pl.BlockSpec((C, 1), lambda n: (0, 0)),          # b3
                pl.BlockSpec((2, HW), lambda n: (0, 0)),         # column masks
            ],
            out_specs=pl.BlockSpec((1, C, HW), lambda n: (n, 0, 0)),
            scratch_shapes=[
                pltpu.VMEM((C, HW + 2 * PAD), jnp.float32),      # shift buffer
            ],
        ),
        compiler_params=pltpu.CompilerParams(
            dimension_semantics=("parallel",),
            vmem_limit_bytes=32 * 1024 * 1024),
    )(x_flat, w1_9, b1c, w2_9, b2c, w3m, b3c, masks)

    return out_flat.reshape(N, C, H, W)


def _reference(x, w1_oihw, b1, w2_oihw, b2, w3_oihw, b3):
    """Pure-JAX f32 reference matching the PyTorch forward (NCHW / OIHW)."""
    def conv(h, w, b, pad):
        y = lax.conv_general_dilated(
            h, w, window_strides=(1, 1), padding=[(pad, pad), (pad, pad)],
            dimension_numbers=("NCHW", "OIHW", "NCHW"),
            precision=lax.Precision.HIGHEST)
        return y + b[None, :, None, None]
    h = jax.nn.relu(conv(x, w1_oihw, b1, 1))
    h = jax.nn.relu(conv(h, w2_oihw, b2, 1))
    h = conv(h, w3_oihw, b3, 0)
    return jax.nn.relu(h + x)


if __name__ == "__main__":
    key = jax.random.PRNGKey(0)
    N, C, H, W = 2, 4, 16, 16

    k_x, k1, k2, k3, kb1, kb2, kb3 = jax.random.split(key, 7)
    x = jax.random.normal(k_x, (N, C, H, W), jnp.float32)

    # Deterministic "init": PyTorch-layout (OIHW) weights, small scale.
    w1 = 0.1 * jax.random.normal(k1, (C, C, 3, 3), jnp.float32)
    w2 = 0.1 * jax.random.normal(k2, (C, C, 3, 3), jnp.float32)
    w3 = 0.1 * jax.random.normal(k3, (C, C, 1, 1), jnp.float32)
    b1 = 0.05 * jax.random.normal(kb1, (C,), jnp.float32)
    b2 = 0.05 * jax.random.normal(kb2, (C,), jnp.float32)
    b3 = 0.05 * jax.random.normal(kb3, (C,), jnp.float32)

    out = eresidual_block(x, w1, b1, w2, b2, w3, b3)
    out = jax.block_until_ready(out)

    ref = _reference(x, w1, b1, w2, b2, w3, b3)
    # f32 data path end to end; tolerance covers MXU internal matmul precision.
    np.testing.assert_allclose(np.asarray(out), np.asarray(ref),
                               rtol=2e-2, atol=2e-2)
    print("KERNEL_OK")
</pallas_src>

<mosaic_0001>
module attributes {stable_mosaic.version = 11 : i64} {
  func.func @_eresidual_kernel(%arg0: i32, %arg1: memref<1x4x256xf32, #tpu.memory_space<vmem>>, %arg2: memref<9x4x4xf32, #tpu.memory_space<vmem>>, %arg3: memref<4x1xf32, #tpu.memory_space<vmem>>, %arg4: memref<9x4x4xf32, #tpu.memory_space<vmem>>, %arg5: memref<4x1xf32, #tpu.memory_space<vmem>>, %arg6: memref<4x4xf32, #tpu.memory_space<vmem>>, %arg7: memref<4x1xf32, #tpu.memory_space<vmem>>, %arg8: memref<2x256xf32, #tpu.memory_space<vmem>>, %arg9: memref<1x4x256xf32, #tpu.memory_space<vmem>>, %arg10: memref<4x512xf32, #tpu.memory_space<vmem>>) attributes {dimension_semantics = [#tpu.dimension_semantics<parallel>], iteration_bounds = array<i64: 2>, scalar_prefetch = 0 : i64, scratch_operands = 1 : i64, tpu.core_type = #tpu.core_type<tc>, window_params = [{transform_indices = @transform_0, window_bounds = array<i64: 1, 4, 256>}, {pipeline_mode = #tpu.pipeline_mode<synchronous>, transform_indices = @transform_1, window_bounds = array<i64: 9, 4, 4>}, {pipeline_mode = #tpu.pipeline_mode<synchronous>, transform_indices = @transform_2, window_bounds = array<i64: 4, 1>}, {pipeline_mode = #tpu.pipeline_mode<synchronous>, transform_indices = @transform_3, window_bounds = array<i64: 9, 4, 4>}, {pipeline_mode = #tpu.pipeline_mode<synchronous>, transform_indices = @transform_4, window_bounds = array<i64: 4, 1>}, {pipeline_mode = #tpu.pipeline_mode<synchronous>, transform_indices = @transform_5, window_bounds = array<i64: 4, 4>}, {pipeline_mode = #tpu.pipeline_mode<synchronous>, transform_indices = @transform_6, window_bounds = array<i64: 4, 1>}, {pipeline_mode = #tpu.pipeline_mode<synchronous>, transform_indices = @transform_7, window_bounds = array<i64: 2, 256>}, {transform_indices = @transform_8, window_bounds = array<i64: 1, 4, 256>}]} {
    %cst = arith.constant 0.000000e+00 : f32
    %0 = vector.broadcast %cst : f32 to vector<4x128xf32>
    %c0 = arith.constant 0 : index
    %c0_0 = arith.constant 0 : index
    %1 = vector.load %arg10[%c0, %c0_0] : memref<4x512xf32, #tpu.memory_space<vmem>>, vector<4x128xf32>
    tpu.vector_store %arg10[%c0, %c0_0], %0 {strides = array<i32>} : memref<4x512xf32, #tpu.memory_space<vmem>>, vector<4x128xf32>,
    %cst_1 = arith.constant 0.000000e+00 : f32
    %2 = vector.broadcast %cst_1 : f32 to vector<4x128xf32>
    %c0_2 = arith.constant 0 : index
    %c384 = arith.constant 384 : index
    %3 = vector.load %arg10[%c0_2, %c384] : memref<4x512xf32, #tpu.memory_space<vmem>>, vector<4x128xf32>
    tpu.vector_store %arg10[%c0_2, %c384], %2 {strides = array<i32>} : memref<4x512xf32, #tpu.memory_space<vmem>>, vector<4x128xf32>,
    %c0_3 = arith.constant 0 : index
    %c0_4 = arith.constant 0 : index
    %4 = vector.load %arg8[%c0_3, %c0_4] : memref<2x256xf32, #tpu.memory_space<vmem>>, vector<1x256xf32>
    %c1 = arith.constant 1 : index
    %c0_5 = arith.constant 0 : index
    %5 = vector.load %arg8[%c1, %c0_5] : memref<2x256xf32, #tpu.memory_space<vmem>>, vector<1x256xf32>
    %c0_6 = arith.constant 0 : index
    %c0_7 = arith.constant 0 : index
    %c0_8 = arith.constant 0 : index
    %6 = vector.load %arg1[%c0_6, %c0_7, %c0_8] : memref<1x4x256xf32, #tpu.memory_space<vmem>>, vector<1x4x256xf32>
    %7 = vector.shape_cast %6 : vector<1x4x256xf32> to vector<4x256xf32>
    %c0_9 = arith.constant 0 : index
    %c128 = arith.constant 128 : index
    %8 = vector.load %arg10[%c0_9, %c128] : memref<4x512xf32, #tpu.memory_space<vmem>>, vector<4x256xf32>
    tpu.vector_store %arg10[%c0_9, %c128], %7 {strides = array<i32>} : memref<4x512xf32, #tpu.memory_space<vmem>>, vector<4x256xf32>,
    %c0_10 = arith.constant 0 : index
    %c111 = arith.constant 111 : index
    %9 = vector.load %arg10[%c0_10, %c111] : memref<4x512xf32, #tpu.memory_space<vmem>>, vector<4x256xf32>
    %c0_11 = arith.constant 0 : index
    %c0_12 = arith.constant 0 : index
    %c0_13 = arith.constant 0 : index
    %10 = vector.load %arg2[%c0_11, %c0_12, %c0_13] : memref<9x4x4xf32, #tpu.memory_space<vmem>>, vector<1x4x4xf32>
    %11 = vector.shape_cast %10 : vector<1x4x4xf32> to vector<4x4xf32>
    %cst_14 = arith.constant dense<0.000000e+00> : vector<4x256xf32>
    %12 = tpu.matmul %11, %9, %cst_14 {dimension_numbers = #tpu.dot_dimension_numbers<[1], [0], [0], [1], [0, 0, 1, 1], [], []>} : vector<4x4xf32>, vector<4x256xf32>, vector<4x256xf32> -> vector<4x256xf32>
    %c0_15 = arith.constant 0 : index
    %c127 = arith.constant 127 : index
    %13 = vector.load %arg10[%c0_15, %c127] : memref<4x512xf32, #tpu.memory_space<vmem>>, vector<4x256xf32>
    %c3 = arith.constant 3 : index
    %c0_16 = arith.constant 0 : index
    %c0_17 = arith.constant 0 : index
    %14 = vector.load %arg2[%c3, %c0_16, %c0_17] : memref<9x4x4xf32, #tpu.memory_space<vmem>>, vector<1x4x4xf32>
    %15 = vector.shape_cast %14 : vector<1x4x4xf32> to vector<4x4xf32>
    %cst_18 = arith.constant dense<0.000000e+00> : vector<4x256xf32>
    %16 = tpu.matmul %15, %13, %cst_18 {dimension_numbers = #tpu.dot_dimension_numbers<[1], [0], [0], [1], [0, 0, 1, 1], [], []>} : vector<4x4xf32>, vector<4x256xf32>, vector<4x256xf32> -> vector<4x256xf32>
    %17 = arith.addf %12, %16 : vector<4x256xf32>
    %c0_19 = arith.constant 0 : index
    %c143 = arith.constant 143 : index
    %18 = vector.load %arg10[%c0_19, %c143] : memref<4x512xf32, #tpu.memory_space<vmem>>, vector<4x256xf32>
    %c6 = arith.constant 6 : index
    %c0_20 = arith.constant 0 : index
    %c0_21 = arith.constant 0 : index
    %19 = vector.load %arg2[%c6, %c0_20, %c0_21] : memref<9x4x4xf32, #tpu.memory_space<vmem>>, vector<1x4x4xf32>
    %20 = vector.shape_cast %19 : vector<1x4x4xf32> to vector<4x4xf32>
    %cst_22 = arith.constant dense<0.000000e+00> : vector<4x256xf32>
    %21 = tpu.matmul %20, %18, %cst_22 {dimension_numbers = #tpu.dot_dimension_numbers<[1], [0], [0], [1], [0, 0, 1, 1], [], []>} : vector<4x4xf32>, vector<4x256xf32>, vector<4x256xf32> -> vector<4x256xf32>
    %22 = arith.addf %17, %21 : vector<4x256xf32>
    %c0_23 = arith.constant 0 : index
    %c112 = arith.constant 112 : index
    %23 = vector.load %arg10[%c0_23, %c112] : memref<4x512xf32, #tpu.memory_space<vmem>>, vector<4x256xf32>
    %c1_24 = arith.constant 1 : index
    %c0_25 = arith.constant 0 : index
    %c0_26 = arith.constant 0 : index
    %24 = vector.load %arg2[%c1_24, %c0_25, %c0_26] : memref<9x4x4xf32, #tpu.memory_space<vmem>>, vector<1x4x4xf32>
    %25 = vector.shape_cast %24 : vector<1x4x4xf32> to vector<4x4xf32>
    %cst_27 = arith.constant dense<0.000000e+00> : vector<4x256xf32>
    %26 = tpu.matmul %25, %23, %cst_27 {dimension_numbers = #tpu.dot_dimension_numbers<[1], [0], [0], [1], [0, 0, 1, 1], [], []>} : vector<4x4xf32>, vector<4x256xf32>, vector<4x256xf32> -> vector<4x256xf32>
    %c0_28 = arith.constant 0 : index
    %c128_29 = arith.constant 128 : index
    %27 = vector.load %arg10[%c0_28, %c128_29] : memref<4x512xf32, #tpu.memory_space<vmem>>, vector<4x256xf32>
    %c4 = arith.constant 4 : index
    %c0_30 = arith.constant 0 : index
    %c0_31 = arith.constant 0 : index
    %28 = vector.load %arg2[%c4, %c0_30, %c0_31] : memref<9x4x4xf32, #tpu.memory_space<vmem>>, vector<1x4x4xf32>
    %29 = vector.shape_cast %28 : vector<1x4x4xf32> to vector<4x4xf32>
    %cst_32 = arith.constant dense<0.000000e+00> : vector<4x256xf32>
    %30 = tpu.matmul %29, %27, %cst_32 {dimension_numbers = #tpu.dot_dimension_numbers<[1], [0], [0], [1], [0, 0, 1, 1], [], []>} : vector<4x4xf32>, vector<4x256xf32>, vector<4x256xf32> -> vector<4x256xf32>
    %31 = arith.addf %26, %30 : vector<4x256xf32>
    %c0_33 = arith.constant 0 : index
    %c144 = arith.constant 144 : index
    %32 = vector.load %arg10[%c0_33, %c144] : memref<4x512xf32, #tpu.memory_space<vmem>>, vector<4x256xf32>
    %c7 = arith.constant 7 : index
    %c0_34 = arith.constant 0 : index
    %c0_35 = arith.constant 0 : index
    %33 = vector.load %arg2[%c7, %c0_34, %c0_35] : memref<9x4x4xf32, #tpu.memory_space<vmem>>, vector<1x4x4xf32>
    %34 = vector.shape_cast %33 : vector<1x4x4xf32> to vector<4x4xf32>
    %cst_36 = arith.constant dense<0.000000e+00> : vector<4x256xf32>
    %35 = tpu.matmul %34, %32, %cst_36 {dimension_numbers = #tpu.dot_dimension_numbers<[1], [0], [0], [1], [0, 0, 1, 1], [], []>} : vector<4x4xf32>, vector<4x256xf32>, vector<4x256xf32> -> vector<4x256xf32>
    %36 = arith.addf %31, %35 : vector<4x256xf32>
    %c0_37 = arith.constant 0 : index
    %c113 = arith.constant 113 : index
    %37 = vector.load %arg10[%c0_37, %c113] : memref<4x512xf32, #tpu.memory_space<vmem>>, vector<4x256xf32>
    %c2 = arith.constant 2 : index
    %c0_38 = arith.constant 0 : index
    %c0_39 = arith.constant 0 : index
    %38 = vector.load %arg2[%c2, %c0_38, %c0_39] : memref<9x4x4xf32, #tpu.memory_space<vmem>>, vector<1x4x4xf32>
    %39 = vector.shape_cast %38 : vector<1x4x4xf32> to vector<4x4xf32>
    %cst_40 = arith.constant dense<0.000000e+00> : vector<4x256xf32>
    %40 = tpu.matmul %39, %37, %cst_40 {dimension_numbers = #tpu.dot_dimension_numbers<[1], [0], [0], [1], [0, 0, 1, 1], [], []>} : vector<4x4xf32>, vector<4x256xf32>, vector<4x256xf32> -> vector<4x256xf32>
    %c0_41 = arith.constant 0 : index
    %c129 = arith.constant 129 : index
    %41 = vector.load %arg10[%c0_41, %c129] : memref<4x512xf32, #tpu.memory_space<vmem>>, vector<4x256xf32>
    %c5 = arith.constant 5 : index
    %c0_42 = arith.constant 0 : index
    %c0_43 = arith.constant 0 : index
    %42 = vector.load %arg2[%c5, %c0_42, %c0_43] : memref<9x4x4xf32, #tpu.memory_space<vmem>>, vector<1x4x4xf32>
    %43 = vector.shape_cast %42 : vector<1x4x4xf32> to vector<4x4xf32>
    %cst_44 = arith.constant dense<0.000000e+00> : vector<4x256xf32>
    %44 = tpu.matmul %43, %41, %cst_44 {dimension_numbers = #tpu.dot_dimension_numbers<[1], [0], [0], [1], [0, 0, 1, 1], [], []>} : vector<4x4xf32>, vector<4x256xf32>, vector<4x256xf32> -> vector<4x256xf32>
    %45 = arith.addf %40, %44 : vector<4x256xf32>
    %c0_45 = arith.constant 0 : index
    %c145 = arith.constant 145 : index
    %46 = vector.load %arg10[%c0_45, %c145] : memref<4x512xf32, #tpu.memory_space<vmem>>, vector<4x256xf32>
    %c8 = arith.constant 8 : index
    %c0_46 = arith.constant 0 : index
    %c0_47 = arith.constant 0 : index
    %47 = vector.load %arg2[%c8, %c0_46, %c0_47] : memref<9x4x4xf32, #tpu.memory_space<vmem>>, vector<1x4x4xf32>
    %48 = vector.shape_cast %47 : vector<1x4x4xf32> to vector<4x4xf32>
    %cst_48 = arith.constant dense<0.000000e+00> : vector<4x256xf32>
    %49 = tpu.matmul %48, %46, %cst_48 {dimension_numbers = #tpu.dot_dimension_numbers<[1], [0], [0], [1], [0, 0, 1, 1], [], []>} : vector<4x4xf32>, vector<4x256xf32>, vector<4x256xf32> -> vector<4x256xf32>
    %50 = arith.addf %45, %49 : vector<4x256xf32>
    %51 = vector.broadcast %4 : vector<1x256xf32> to vector<4x256xf32>
    %52 = arith.mulf %22, %51 : vector<4x256xf32>
    %53 = arith.addf %52, %36 : vector<4x256xf32>
    %54 = vector.broadcast %5 : vector<1x256xf32> to vector<4x256xf32>
    %55 = arith.mulf %50, %54 : vector<4x256xf32>
    %56 = arith.addf %53, %55 : vector<4x256xf32>
    %c0_49 = arith.constant 0 : index
    %c0_50 = arith.constant 0 : index
    %57 = vector.load %arg3[%c0_49, %c0_50] : memref<4x1xf32, #tpu.memory_space<vmem>>, vector<4x1xf32>
    %58 = vector.broadcast %57 : vector<4x1xf32> to vector<4x256xf32>
    %59 = arith.addf %56, %58 : vector<4x256xf32>
    %cst_51 = arith.constant 0.000000e+00 : f32
    %60 = vector.broadcast %cst_51 : f32 to vector<4x256xf32>
    %61 = arith.maximumf %59, %60 : vector<4x256xf32>
    %c0_52 = arith.constant 0 : index
    %c128_53 = arith.constant 128 : index
    %62 = vector.load %arg10[%c0_52, %c128_53] : memref<4x512xf32, #tpu.memory_space<vmem>>, vector<4x256xf32>
    tpu.vector_store %arg10[%c0_52, %c128_53], %61 {strides = array<i32>} : memref<4x512xf32, #tpu.memory_space<vmem>>, vector<4x256xf32>,
    %c0_54 = arith.constant 0 : index
    %c111_55 = arith.constant 111 : index
    %63 = vector.load %arg10[%c0_54, %c111_55] : memref<4x512xf32, #tpu.memory_space<vmem>>, vector<4x256xf32>
    %c0_56 = arith.constant 0 : index
    %c0_57 = arith.constant 0 : index
    %c0_58 = arith.constant 0 : index
    %64 = vector.load %arg4[%c0_56, %c0_57, %c0_58] : memref<9x4x4xf32, #tpu.memory_space<vmem>>, vector<1x4x4xf32>
    %65 = vector.shape_cast %64 : vector<1x4x4xf32> to vector<4x4xf32>
    %cst_59 = arith.constant dense<0.000000e+00> : vector<4x256xf32>
    %66 = tpu.matmul %65, %63, %cst_59 {dimension_numbers = #tpu.dot_dimension_numbers<[1], [0], [0], [1], [0, 0, 1, 1], [], []>} : vector<4x4xf32>, vector<4x256xf32>, vector<4x256xf32> -> vector<4x256xf32>
    %c0_60 = arith.constant 0 : index
    %c127_61 = arith.constant 127 : index
    %67 = vector.load %arg10[%c0_60, %c127_61] : memref<4x512xf32, #tpu.memory_space<vmem>>, vector<4x256xf32>
    %c3_62 = arith.constant 3 : index
    %c0_63 = arith.constant 0 : index
    %c0_64 = arith.constant 0 : index
    %68 = vector.load %arg4[%c3_62, %c0_63, %c0_64] : memref<9x4x4xf32, #tpu.memory_space<vmem>>, vector<1x4x4xf32>
    %69 = vector.shape_cast %68 : vector<1x4x4xf32> to vector<4x4xf32>
    %cst_65 = arith.constant dense<0.000000e+00> : vector<4x256xf32>
    %70 = tpu.matmul %69, %67, %cst_65 {dimension_numbers = #tpu.dot_dimension_numbers<[1], [0], [0], [1], [0, 0, 1, 1], [], []>} : vector<4x4xf32>, vector<4x256xf32>, vector<4x256xf32> -> vector<4x256xf32>
    %71 = arith.addf %66, %70 : vector<4x256xf32>
    %c0_66 = arith.constant 0 : index
    %c143_67 = arith.constant 143 : index
    %72 = vector.load %arg10[%c0_66, %c143_67] : memref<4x512xf32, #tpu.memory_space<vmem>>, vector<4x256xf32>
    %c6_68 = arith.constant 6 : index
    %c0_69 = arith.constant 0 : index
    %c0_70 = arith.constant 0 : index
    %73 = vector.load %arg4[%c6_68, %c0_69, %c0_70] : memref<9x4x4xf32, #tpu.memory_space<vmem>>, vector<1x4x4xf32>
    %74 = vector.shape_cast %73 : vector<1x4x4xf32> to vector<4x4xf32>
    %cst_71 = arith.constant dense<0.000000e+00> : vector<4x256xf32>
    %75 = tpu.matmul %74, %72, %cst_71 {dimension_numbers = #tpu.dot_dimension_numbers<[1], [0], [0], [1], [0, 0, 1, 1], [], []>} : vector<4x4xf32>, vector<4x256xf32>, vector<4x256xf32> -> vector<4x256xf32>
    %76 = arith.addf %71, %75 : vector<4x256xf32>
    %c0_72 = arith.constant 0 : index
    %c112_73 = arith.constant 112 : index
    %77 = vector.load %arg10[%c0_72, %c112_73] : memref<4x512xf32, #tpu.memory_space<vmem>>, vector<4x256xf32>
    %c1_74 = arith.constant 1 : index
    %c0_75 = arith.constant 0 : index
    %c0_76 = arith.constant 0 : index
    %78 = vector.load %arg4[%c1_74, %c0_75, %c0_76] : memref<9x4x4xf32, #tpu.memory_space<vmem>>, vector<1x4x4xf32>
    %79 = vector.shape_cast %78 : vector<1x4x4xf32> to vector<4x4xf32>
    %cst_77 = arith.constant dense<0.000000e+00> : vector<4x256xf32>
    %80 = tpu.matmul %79, %77, %cst_77 {dimension_numbers = #tpu.dot_dimension_numbers<[1], [0], [0], [1], [0, 0, 1, 1], [], []>} : vector<4x4xf32>, vector<4x256xf32>, vector<4x256xf32> -> vector<4x256xf32>
    %c0_78 = arith.constant 0 : index
    %c128_79 = arith.constant 128 : index
    %81 = vector.load %arg10[%c0_78, %c128_79] : memref<4x512xf32, #tpu.memory_space<vmem>>, vector<4x256xf32>
    %c4_80 = arith.constant 4 : index
    %c0_81 = arith.constant 0 : index
    %c0_82 = arith.constant 0 : index
    %82 = vector.load %arg4[%c4_80, %c0_81, %c0_82] : memref<9x4x4xf32, #tpu.memory_space<vmem>>, vector<1x4x4xf32>
    %83 = vector.shape_cast %82 : vector<1x4x4xf32> to vector<4x4xf32>
    %cst_83 = arith.constant dense<0.000000e+00> : vector<4x256xf32>
    %84 = tpu.matmul %83, %81, %cst_83 {dimension_numbers = #tpu.dot_dimension_numbers<[1], [0], [0], [1], [0, 0, 1, 1], [], []>} : vector<4x4xf32>, vector<4x256xf32>, vector<4x256xf32> -> vector<4x256xf32>
    %85 = arith.addf %80, %84 : vector<4x256xf32>
    %c0_84 = arith.constant 0 : index
    %c144_85 = arith.constant 144 : index
    %86 = vector.load %arg10[%c0_84, %c144_85] : memref<4x512xf32, #tpu.memory_space<vmem>>, vector<4x256xf32>
    %c7_86 = arith.constant 7 : index
    %c0_87 = arith.constant 0 : index
    %c0_88 = arith.constant 0 : index
    %87 = vector.load %arg4[%c7_86, %c0_87, %c0_88] : memref<9x4x4xf32, #tpu.memory_space<vmem>>, vector<1x4x4xf32>
    %88 = vector.shape_cast %87 : vector<1x4x4xf32> to vector<4x4xf32>
    %cst_89 = arith.constant dense<0.000000e+00> : vector<4x256xf32>
    %89 = tpu.matmul %88, %86, %cst_89 {dimension_numbers = #tpu.dot_dimension_numbers<[1], [0], [0], [1], [0, 0, 1, 1], [], []>} : vector<4x4xf32>, vector<4x256xf32>, vector<4x256xf32> -> vector<4x256xf32>
    %90 = arith.addf %85, %89 : vector<4x256xf32>
    %c0_90 = arith.constant 0 : index
    %c113_91 = arith.constant 113 : index
    %91 = vector.load %arg10[%c0_90, %c113_91] : memref<4x512xf32, #tpu.memory_space<vmem>>, vector<4x256xf32>
    %c2_92 = arith.constant 2 : index
    %c0_93 = arith.constant 0 : index
    %c0_94 = arith.constant 0 : index
    %92 = vector.load %arg4[%c2_92, %c0_93, %c0_94] : memref<9x4x4xf32, #tpu.memory_space<vmem>>, vector<1x4x4xf32>
    %93 = vector.shape_cast %92 : vector<1x4x4xf32> to vector<4x4xf32>
    %cst_95 = arith.constant dense<0.000000e+00> : vector<4x256xf32>
    %94 = tpu.matmul %93, %91, %cst_95 {dimension_numbers = #tpu.dot_dimension_numbers<[1], [0], [0], [1], [0, 0, 1, 1], [], []>} : vector<4x4xf32>, vector<4x256xf32>, vector<4x256xf32> -> vector<4x256xf32>
    %c0_96 = arith.constant 0 : index
    %c129_97 = arith.constant 129 : index
    %95 = vector.load %arg10[%c0_96, %c129_97] : memref<4x512xf32, #tpu.memory_space<vmem>>, vector<4x256xf32>
    %c5_98 = arith.constant 5 : index
    %c0_99 = arith.constant 0 : index
    %c0_100 = arith.constant 0 : index
    %96 = vector.load %arg4[%c5_98, %c0_99, %c0_100] : memref<9x4x4xf32, #tpu.memory_space<vmem>>, vector<1x4x4xf32>
    %97 = vector.shape_cast %96 : vector<1x4x4xf32> to vector<4x4xf32>
    %cst_101 = arith.constant dense<0.000000e+00> : vector<4x256xf32>
    %98 = tpu.matmul %97, %95, %cst_101 {dimension_numbers = #tpu.dot_dimension_numbers<[1], [0], [0], [1], [0, 0, 1, 1], [], []>} : vector<4x4xf32>, vector<4x256xf32>, vector<4x256xf32> -> vector<4x256xf32>
    %99 = arith.addf %94, %98 : vector<4x256xf32>
    %c0_102 = arith.constant 0 : index
    %c145_103 = arith.constant 145 : index
    %100 = vector.load %arg10[%c0_102, %c145_103] : memref<4x512xf32, #tpu.memory_space<vmem>>, vector<4x256xf32>
    %c8_104 = arith.constant 8 : index
    %c0_105 = arith.constant 0 : index
    %c0_106 = arith.constant 0 : index
    %101 = vector.load %arg4[%c8_104, %c0_105, %c0_106] : memref<9x4x4xf32, #tpu.memory_space<vmem>>, vector<1x4x4xf32>
    %102 = vector.shape_cast %101 : vector<1x4x4xf32> to vector<4x4xf32>
    %cst_107 = arith.constant dense<0.000000e+00> : vector<4x256xf32>
    %103 = tpu.matmul %102, %100, %cst_107 {dimension_numbers = #tpu.dot_dimension_numbers<[1], [0], [0], [1], [0, 0, 1, 1], [], []>} : vector<4x4xf32>, vector<4x256xf32>, vector<4x256xf32> -> vector<4x256xf32>
    %104 = arith.addf %99, %103 : vector<4x256xf32>
    %105 = vector.broadcast %4 : vector<1x256xf32> to vector<4x256xf32>
    %106 = arith.mulf %76, %105 : vector<4x256xf32>
    %107 = arith.addf %106, %90 : vector<4x256xf32>
    %108 = vector.broadcast %5 : vector<1x256xf32> to vector<4x256xf32>
    %109 = arith.mulf %104, %108 : vector<4x256xf32>
    %110 = arith.addf %107, %109 : vector<4x256xf32>
    %c0_108 = arith.constant 0 : index
    %c0_109 = arith.constant 0 : index
    %111 = vector.load %arg5[%c0_108, %c0_109] : memref<4x1xf32, #tpu.memory_space<vmem>>, vector<4x1xf32>
    %112 = vector.broadcast %111 : vector<4x1xf32> to vector<4x256xf32>
    %113 = arith.addf %110, %112 : vector<4x256xf32>
    %cst_110 = arith.constant 0.000000e+00 : f32
    %114 = vector.broadcast %cst_110 : f32 to vector<4x256xf32>
    %115 = arith.maximumf %113, %114 : vector<4x256xf32>
    %c0_111 = arith.constant 0 : index
    %c0_112 = arith.constant 0 : index
    %116 = vector.load %arg6[%c0_111, %c0_112] : memref<4x4xf32, #tpu.memory_space<vmem>>, vector<4x4xf32>
    %cst_113 = arith.constant dense<0.000000e+00> : vector<4x256xf32>
    %117 = tpu.matmul %116, %115, %cst_113 {dimension_numbers = #tpu.dot_dimension_numbers<[1], [0], [0], [1], [0, 0, 1, 1], [], []>} : vector<4x4xf32>, vector<4x256xf32>, vector<4x256xf32> -> vector<4x256xf32>
    %c0_114 = arith.constant 0 : index
    %c0_115 = arith.constant 0 : index
    %118 = vector.load %arg7[%c0_114, %c0_115] : memref<4x1xf32, #tpu.memory_space<vmem>>, vector<4x1xf32>
    %119 = vector.broadcast %118 : vector<4x1xf32> to vector<4x256xf32>
    %120 = arith.addf %117, %119 : vector<4x256xf32>
    %121 = arith.addf %120, %7 : vector<4x256xf32>
    %cst_116 = arith.constant 0.000000e+00 : f32
    %122 = vector.broadcast %cst_116 : f32 to vector<4x256xf32>
    %123 = arith.maximumf %121, %122 : vector<4x256xf32>
    %c0_117 = arith.constant 0 : index
    %c0_118 = arith.constant 0 : index
    %c0_119 = arith.constant 0 : index
    %124 = vector.load %arg9[%c0_117, %c0_118, %c0_119] : memref<1x4x256xf32, #tpu.memory_space<vmem>>, vector<1x4x256xf32>
    %125 = vector.shape_cast %124 : vector<1x4x256xf32> to vector<4x256xf32>
    %126 = vector.shape_cast %123 : vector<4x256xf32> to vector<1x4x256xf32>
    tpu.vector_store %arg9[%c0_117, %c0_118, %c0_119], %126 {strides = array<i32>} : memref<1x4x256xf32, #tpu.memory_space<vmem>>, vector<1x4x256xf32>,
    return
  }
  func.func @transform_0(%arg0: i32) -> (i32, i32, i32) {
    %c0_i32 = arith.constant 0 : i32
    %c0_i32_0 = arith.constant 0 : i32
    %c0_i32_1 = arith.constant 0 : i32
    return %arg0, %c0_i32, %c0_i32_0 : i32, i32, i32
  }
  func.func @transform_1(%arg0: i32) -> (i32, i32, i32) {
    %c0_i32 = arith.constant 0 : i32
    %c0_i32_0 = arith.constant 0 : i32
    %c0_i32_1 = arith.constant 0 : i32
    %c0_i32_2 = arith.constant 0 : i32
    return %c0_i32, %c0_i32_0, %c0_i32_1 : i32, i32, i32
  }
  func.func @transform_2(%arg0: i32) -> (i32, i32) {
    %c0_i32 = arith.constant 0 : i32
    %c0_i32_0 = arith.constant 0 : i32
    %c0_i32_1 = arith.constant 0 : i32
    return %c0_i32, %c0_i32_0 : i32, i32
  }
  func.func @transform_3(%arg0: i32) -> (i32, i32, i32) {
    %c0_i32 = arith.constant 0 : i32
    %c0_i32_0 = arith.constant 0 : i32
    %c0_i32_1 = arith.constant 0 : i32
    %c0_i32_2 = arith.constant 0 : i32
    return %c0_i32, %c0_i32_0, %c0_i32_1 : i32, i32, i32
  }
  func.func @transform_4(%arg0: i32) -> (i32, i32) {
    %c0_i32 = arith.constant 0 : i32
    %c0_i32_0 = arith.constant 0 : i32
    %c0_i32_1 = arith.constant 0 : i32
    return %c0_i32, %c0_i32_0 : i32, i32
  }
  func.func @transform_5(%arg0: i32) -> (i32, i32) {
    %c0_i32 = arith.constant 0 : i32
    %c0_i32_0 = arith.constant 0 : i32
    %c0_i32_1 = arith.constant 0 : i32
    return %c0_i32, %c0_i32_0 : i32, i32
  }
  func.func @transform_6(%arg0: i32) -> (i32, i32) {
    %c0_i32 = arith.constant 0 : i32
    %c0_i32_0 = arith.constant 0 : i32
    %c0_i32_1 = arith.constant 0 : i32
    return %c0_i32, %c0_i32_0 : i32, i32
  }
  func.func @transform_7(%arg0: i32) -> (i32, i32) {
    %c0_i32 = arith.constant 0 : i32
    %c0_i32_0 = arith.constant 0 : i32
    %c0_i32_1 = arith.constant 0 : i32
    return %c0_i32, %c0_i32_0 : i32, i32
  }
  func.func @transform_8(%arg0: i32) -> (i32, i32, i32) {
    %c0_i32 = arith.constant 0 : i32
    %c0_i32_0 = arith.constant 0 : i32
    %c0_i32_1 = arith.constant 0 : i32
    return %arg0, %c0_i32, %c0_i32_0 : i32, i32, i32
  }
}

</mosaic_0001>

<llo_original>
// kernel: tpu_custom_call.1
$region0: #{tpu_custom_call.1}
  #allocation0 [shape = 'u32[]', space=smem, size = 0x4, offset = 0x4, fixed_abs, tag = 'smem constant byte address 0x4 - core index']
  #allocation1 [shape = 'u32[144,128]{1,0:T(1,128)}', space=vmem, size = 0x12000, scoped, tag = 'internal scratch']
  #allocation2 [shape = 'f32[4,512]{1,0:T(4,128)}', space=vmem, size = 0x2000, scoped, tag = 'scratch operand']
  %s0 = inlined_call_operand.vmem [shape: f32[2,4,256], index: 0, kind: input, shape index: {}]
  %s1 = inlined_call_operand.vmem [shape: f32[9,4,4], index: 1, kind: input, shape index: {}]
  %s2 = inlined_call_operand.vmem [shape: f32[4,1], index: 2, kind: input, shape index: {}]
  %s3 = inlined_call_operand.vmem [shape: f32[9,4,4], index: 3, kind: input, shape index: {}]
  %s4 = inlined_call_operand.vmem [shape: f32[4,1], index: 4, kind: input, shape index: {}]
  %s5 = inlined_call_operand.vmem [shape: f32[4,4], index: 5, kind: input, shape index: {}]
  %s6 = inlined_call_operand.vmem [shape: f32[4,1], index: 6, kind: input, shape index: {}]
  %s7 = inlined_call_operand.vmem [shape: f32[2,256], index: 7, kind: input, shape index: {}]
  %s8 = inlined_call_operand.hbm [shape: f32[2,4,256], index: 8, kind: output, shape index: {}]
  %s9 = sld [smem:[#allocation0]]
  $region65: #{tpu_custom_call.1} parent=0
    _
  %s11 = ssub.s32 1, %s9
  %s12 = scalar_select 0, %s11, %s9
  $region1: #{tpu_custom_call.1} parent=0
    #allocation3 [shape = 'u8[8192]{0}', space=vmem, size = 0x2000, scoped, tag = 'output window, operand 0']
    #allocation4 [shape = 's32[2]{0}', space=sflag, size = 0x8, scoped, tag = 'scoped memory for tpu_custom_call.1']
    %13 = vsyncpa [#allocation4], 0
    %s14 = scalar_lea.sflag [#allocation4], 1
    %15 = vsyncpa %s14, 0
    loop: start=0, step=1, limit=4
    $region2: #{tpu_custom_call.1} parent=1 // loop_pre_header
      _
    $region3: #{tpu_custom_call.1} parent=1 // loop_header
      %s17 = sphi 0, %s21
      %p18 = scmp.ge.s32.totalorder %s17, 4
      %s27 = sphi 0, %s29
      %s30 = sphi 0, %s27
      %s31 = sphi 0, %s30
      %s47 = sphi 0, %s31
      %s51 = sphi 0, %s51
      %s53 = sphi 0, %s51
      %s54 = sphi 0, %s53
      %s68 = sphi 0, %s54
      %s72 = sphi 0, %s72
      %s74 = sphi 0, %s72
      %s75 = sphi 0, %s74
      %s89 = sphi 0, %s75
      %s93 = sphi 0, %s93
      %s95 = sphi 0, %s93
      %s96 = sphi 0, %s95
      %s110 = sphi 0, %s96
      %s114 = sphi 0, %s114
      %s116 = sphi 0, %s114
      %s117 = sphi 0, %s116
      %s131 = sphi 0, %s117
      %s135 = sphi 0, %s135
      %s137 = sphi 0, %s135
      %s138 = sphi 0, %s137
      %s152 = sphi 0, %s138
      %s156 = sphi 0, %s156
      %s158 = sphi 0, %s156
      %s159 = sphi 0, %s158
      %s173 = sphi 0, %s159
      %s177 = sphi 0, %s177
      %s179 = sphi 0, %s177
      %s180 = sphi 0, %s179
      %s194 = sphi 0, %s180
      %s200 = sphi 0, %s202
      %s203 = sphi 0, %s200
      %s204 = sphi 0, %s203
      %s220 = sphi 0, %s204
    $region4: #{tpu_custom_call.1} parent=1 // loop_header_branch
      %20 = sbr.rel (%p18) target = $region8
    $region5: #{tpu_custom_call.1} parent=1 // loop_body
      %s22 = ssub.s32 %s17, 1
      %s23 = ssub.s32 %s17, 2
      %s24 = sadd.s32 %s17, 1
      %s25 = ssub.s32 %s17, %s24
      %p26 = scmp.eq.s32.totalorder %s25, 0
      %s28 = sadd.s32 %s27, 1
      %s29 = scalar_select %p26, %s27, %s28
      %p32 = pneg %p26
      %p33 = scmp.eq.s32.totalorder %s17, 1
      %p34 = por %p32, %p33
      %p35 = scmp.ne.s32.totalorder %s27, %s30
      %p36 = scmp.eq.s32.totalorder %s17, 0
      %p37 = por %p35, %p36
      %p38 = scmp.ne.s32.totalorder %s27, %s30
      %p39 = scmp.eq.s32.totalorder %s22, 1
      %p40 = por %p38, %p39
      %p41 = scmp.ne.s32.totalorder %s30, %s31
      %p42 = scmp.eq.s32.totalorder %s22, 0
      %p43 = por %p41, %p42
      %p44 = scmp.ne.s32.totalorder %s30, %s31
      %p45 = scmp.eq.s32.totalorder %s23, 1
      %p46 = por %p44, %p45
      %p48 = scmp.ne.s32.totalorder %s31, %s47
      %p49 = scmp.eq.s32.totalorder %s23, 0
      %p50 = por %p48, %p49
      %s52 = sadd.s32 %s51, 1
      %p55 = scmp.eq.s32.totalorder %s17, 1
      %p56 = scmp.ne.s32.totalorder %s51, %s53
      %p57 = scmp.eq.s32.totalorder %s17, 0
      %p58 = por %p56, %p57
      %p59 = scmp.ne.s32.totalorder %s51, %s53
      %p60 = scmp.eq.s32.totalorder %s22, 1
      %p61 = por %p59, %p60
      %p62 = scmp.ne.s32.totalorder %s53, %s54
      %p63 = scmp.eq.s32.totalorder %s22, 0
      %p64 = por %p62, %p63
      %p65 = scmp.ne.s32.totalorder %s53, %s54
      %p66 = scmp.eq.s32.totalorder %s23, 1
      %p67 = por %p65, %p66
      %p69 = scmp.ne.s32.totalorder %s54, %s68
      %p70 = scmp.eq.s32.totalorder %s23, 0
      %p71 = por %p69, %p70
      %s73 = sadd.s32 %s72, 1
      %p76 = scmp.eq.s32.totalorder %s17, 1
      %p77 = scmp.ne.s32.totalorder %s72, %s74
      %p78 = scmp.eq.s32.totalorder %s17, 0
      %p79 = por %p77, %p78
      %p80 = scmp.ne.s32.totalorder %s72, %s74
      %p81 = scmp.eq.s32.totalorder %s22, 1
      %p82 = por %p80, %p81
      %p83 = scmp.ne.s32.totalorder %s74, %s75
      %p84 = scmp.eq.s32.totalorder %s22, 0
      %p85 = por %p83, %p84
      %p86 = scmp.ne.s32.totalorder %s74, %s75
      %p87 = scmp.eq.s32.totalorder %s23, 1
      %p88 = por %p86, %p87
      %p90 = scmp.ne.s32.totalorder %s75, %s89
      %p91 = scmp.eq.s32.totalorder %s23, 0
      %p92 = por %p90, %p91
      %s94 = sadd.s32 %s93, 1
      %p97 = scmp.eq.s32.totalorder %s17, 1
      %p98 = scmp.ne.s32.totalorder %s93, %s95
      %p99 = scmp.eq.s32.totalorder %s17, 0
      %p100 = por %p98, %p99
      %p101 = scmp.ne.s32.totalorder %s93, %s95
      %p102 = scmp.eq.s32.totalorder %s22, 1
      %p103 = por %p101, %p102
      %p104 = scmp.ne.s32.totalorder %s95, %s96
      %p105 = scmp.eq.s32.totalorder %s22, 0
      %p106 = por %p104, %p105
      %p107 = scmp.ne.s32.totalorder %s95, %s96
      %p108 = scmp.eq.s32.totalorder %s23, 1
      %p109 = por %p107, %p108
      %p111 = scmp.ne.s32.totalorder %s96, %s110
      %p112 = scmp.eq.s32.totalorder %s23, 0
      %p113 = por %p111, %p112
      %s115 = sadd.s32 %s114, 1
      %p118 = scmp.eq.s32.totalorder %s17, 1
      %p119 = scmp.ne.s32.totalorder %s114, %s116
      %p120 = scmp.eq.s32.totalorder %s17, 0
      %p121 = por %p119, %p120
      %p122 = scmp.ne.s32.totalorder %s114, %s116
      %p123 = scmp.eq.s32.totalorder %s22, 1
      %p124 = por %p122, %p123
      %p125 = scmp.ne.s32.totalorder %s116, %s117
      %p126 = scmp.eq.s32.totalorder %s22, 0
      %p127 = por %p125, %p126
      %p128 = scmp.ne.s32.totalorder %s116, %s117
      %p129 = scmp.eq.s32.totalorder %s23, 1
      %p130 = por %p128, %p129
      %p132 = scmp.ne.s32.totalorder %s117, %s131
      %p133 = scmp.eq.s32.totalorder %s23, 0
      %p134 = por %p132, %p133
      %s136 = sadd.s32 %s135, 1
      %p139 = scmp.eq.s32.totalorder %s17, 1
      %p140 = scmp.ne.s32.totalorder %s135, %s137
      %p141 = scmp.eq.s32.totalorder %s17, 0
      %p142 = por %p140, %p141
      %p143 = scmp.ne.s32.totalorder %s135, %s137
      %p144 = scmp.eq.s32.totalorder %s22, 1
      %p145 = por %p143, %p144
      %p146 = scmp.ne.s32.totalorder %s137, %s138
      %p147 = scmp.eq.s32.totalorder %s22, 0
      %p148 = por %p146, %p147
      %p149 = scmp.ne.s32.totalorder %s137, %s138
      %p150 = scmp.eq.s32.totalorder %s23, 1
      %p151 = por %p149, %p150
      %p153 = scmp.ne.s32.totalorder %s138, %s152
      %p154 = scmp.eq.s32.totalorder %s23, 0
      %p155 = por %p153, %p154
      %s157 = sadd.s32 %s156, 1
      %p160 = scmp.eq.s32.totalorder %s17, 1
      %p161 = scmp.ne.s32.totalorder %s156, %s158
      %p162 = scmp.eq.s32.totalorder %s17, 0
      %p163 = por %p161, %p162
      %p164 = scmp.ne.s32.totalorder %s156, %s158
      %p165 = scmp.eq.s32.totalorder %s22, 1
      %p166 = por %p164, %p165
      %p167 = scmp.ne.s32.totalorder %s158, %s159
      %p168 = scmp.eq.s32.totalorder %s22, 0
      %p169 = por %p167, %p168
      %p170 = scmp.ne.s32.totalorder %s158, %s159
      %p171 = scmp.eq.s32.totalorder %s23, 1
      %p172 = por %p170, %p171
      %p174 = scmp.ne.s32.totalorder %s159, %s173
      %p175 = scmp.eq.s32.totalorder %s23, 0
      %p176 = por %p174, %p175
      %s178 = sadd.s32 %s177, 1
      %p181 = scmp.eq.s32.totalorder %s17, 1
      %p182 = scmp.ne.s32.totalorder %s177, %s179
      %p183 = scmp.eq.s32.totalorder %s17, 0
      %p184 = por %p182, %p183
      %p185 = scmp.ne.s32.totalorder %s177, %s179
      %p186 = scmp.eq.s32.totalorder %s22, 1
      %p187 = por %p185, %p186
      %p188 = scmp.ne.s32.totalorder %s179, %s180
      %p189 = scmp.eq.s32.totalorder %s22, 0
      %p190 = por %p188, %p189
      %p191 = scmp.ne.s32.totalorder %s179, %s180
      %p192 = scmp.eq.s32.totalorder %s23, 1
      %p193 = por %p191, %p192
      %p195 = scmp.ne.s32.totalorder %s180, %s194
      %p196 = scmp.eq.s32.totalorder %s23, 0
      %p197 = por %p195, %p196
      %s198 = ssub.s32 %s17, %s24
      %p199 = scmp.eq.s32.totalorder %s198, 0
      %s201 = sadd.s32 %s200, 1
      %s202 = scalar_select %p199, %s200, %s201
      %p205 = pneg %p199
      %p206 = scmp.eq.s32.totalorder %s17, 1
      %p207 = por %p205, %p206
      %p208 = scmp.ne.s32.totalorder %s200, %s203
      %p209 = scmp.eq.s32.totalorder %s17, 0
      %p210 = por %p208, %p209
      %p211 = scmp.ne.s32.totalorder %s200, %s203
      %p212 = scmp.eq.s32.totalorder %s22, 1
      %p213 = por %p211, %p212
      %p214 = scmp.ne.s32.totalorder %s203, %s204
      %p215 = scmp.eq.s32.totalorder %s22, 0
      %p216 = por %p214, %p215
      %p217 = scmp.ne.s32.totalorder %s203, %s204
      %p218 = scmp.eq.s32.totalorder %s23, 1
      %p219 = por %p217, %p218
      %p221 = scmp.ne.s32.totalorder %s204, %s220
      %p222 = scmp.eq.s32.totalorder %s23, 0
      %p223 = por %p221, %p222
      %p224 = scmp.le.s32.totalorder 1, %s17
      %p225 = scmp.lt.s32.totalorder %s17, 3
      %p226 = pnand %p224, %p225
      %p227 = pneg %p226
      // Predicated region
      $region9: #{tpu_custom_call.1} parent=5 // pred_check
        _
      $region10: #{tpu_custom_call.1} parent=5 // pred_check_branch
        %229 = sbr.rel (%p226) target = $region12
      $region11: #{tpu_custom_call.1} parent=5 // pred_region
        %s230 = ssub.s32 %s17, 1
        // Predicated region
        $region13: #{tpu_custom_call.1} parent=11 // pred_check
          %p231 = pneg %p64
        $region14: #{tpu_custom_call.1} parent=11 // pred_check_branch
          %233 = sbr.rel (%p231) target = $region16
        $region15: #{tpu_custom_call.1} parent=11 // pred_region
          _
        $region16: #{tpu_custom_call.1} parent=11 // pred_fallthru
          _
        // Predicated region
        $region17: #{tpu_custom_call.1} parent=11 // pred_check
          %p234 = pneg %p85
        $region18: #{tpu_custom_call.1} parent=11 // pred_check_branch
          %236 = sbr.rel (%p234) target = $region20
        $region19: #{tpu_custom_call.1} parent=11 // pred_region
          _
        $region20: #{tpu_custom_call.1} parent=11 // pred_fallthru
          _
        // Predicated region
        $region21: #{tpu_custom_call.1} parent=11 // pred_check
          %p237 = pneg %p106
        $region22: #{tpu_custom_call.1} parent=11 // pred_check_branch
          %239 = sbr.rel (%p237) target = $region24
        $region23: #{tpu_custom_call.1} parent=11 // pred_region
          _
        $region24: #{tpu_custom_call.1} parent=11 // pred_fallthru
          _
        // Predicated region
        $region25: #{tpu_custom_call.1} parent=11 // pred_check
          %p240 = pneg %p127
        $region26: #{tpu_custom_call.1} parent=11 // pred_check_branch
          %242 = sbr.rel (%p240) target = $region28
        $region27: #{tpu_custom_call.1} parent=11 // pred_region
          _
        $region28: #{tpu_custom_call.1} parent=11 // pred_fallthru
          _
        // Predicated region
        $region29: #{tpu_custom_call.1} parent=11 // pred_check
          %p243 = pneg %p148
        $region30: #{tpu_custom_call.1} parent=11 // pred_check_branch
          %245 = sbr.rel (%p243) target = $region32
        $region31: #{tpu_custom_call.1} parent=11 // pred_region
          _
        $region32: #{tpu_custom_call.1} parent=11 // pred_fallthru
          _
        // Predicated region
        $region33: #{tpu_custom_call.1} parent=11 // pred_check
          %p246 = pneg %p169
        $region34: #{tpu_custom_call.1} parent=11 // pred_check_branch
          %248 = sbr.rel (%p246) target = $region36
        $region35: #{tpu_custom_call.1} parent=11 // pred_region
          _
        $region36: #{tpu_custom_call.1} parent=11 // pred_fallthru
          _
        // Predicated region
        $region37: #{tpu_custom_call.1} parent=11 // pred_check
          %p249 = pneg %p190
        $region38: #{tpu_custom_call.1} parent=11 // pred_check_branch
          %251 = sbr.rel (%p249) target = $region40
        $region39: #{tpu_custom_call.1} parent=11 // pred_region
          _
        $region40: #{tpu_custom_call.1} parent=11 // pred_fallthru
          _
      $region12: #{tpu_custom_call.1} parent=5 // pred_fallthru
        _
      %p252 = scmp.lt.s32.totalorder %s17, 2
      // Predicated region
      $region41: #{tpu_custom_call.1} parent=5 // pred_check
        %p253 = pneg %p252
      $region42: #{tpu_custom_call.1} parent=5 // pred_check_branch
        %255 = sbr.rel (%p253) target = $region44
      $region43: #{tpu_custom_call.1} parent=5 // pred_region
        // Predicated region
        $region45: #{tpu_custom_call.1} parent=43 // pred_check
          %p256 = pneg %p37
        $region46: #{tpu_custom_call.1} parent=43 // pred_check_branch
          %258 = sbr.rel (%p256) target = $region48
        $region47: #{tpu_custom_call.1} parent=43 // pred_region
          %p259 = scmp.lt.s32.totalorder %s17, 1
          %s260 = scalar_select %p259, %s17, 1
          %s261 = smul.addr %s260, 2
          %s262 = smul.addr %s261, 4
          %s263 = scalar_lea.vmem %s0, %s262
        $region48: #{tpu_custom_call.1} parent=43 // pred_fallthru
          _
      $region44: #{tpu_custom_call.1} parent=5 // pred_fallthru
        _
      %p264 = scmp.le.s32.totalorder 1, %s17
      %p265 = scmp.lt.s32.totalorder %s17, 3
      %p266 = pnand %p264, %p265
      %p267 = pneg %p266
      // Predicated region
      $region49: #{tpu_custom_call.1} parent=5 // pred_check
        _
      $region50: #{tpu_custom_call.1} parent=5 // pred_check_branch
        %269 = sbr.rel (%p266) target = $region52
      $region51: #{tpu_custom_call.1} parent=5 // pred_region
        %s270 = ssub.s32 %s17, 1
        %p271 = scmp.lt.s32.totalorder %s22, 1
        %s272 = scalar_select %p271, %s22, 1
        %s273 = smul.addr %s272, 2
        %s274 = smul.addr %s273, 4
        %s275 = scalar_lea.vmem %s0, %s274
        %p276 = pneg %p43
        %p277 = pneg %p40
        %p278 = pneg %p64
        %p279 = pneg %p61
        %p280 = pneg %p85
        %p281 = pneg %p82
        %p282 = pneg %p106
        %p283 = pneg %p103
        %p284 = pneg %p127
        %p285 = pneg %p124
        %p286 = pneg %p148
        %p287 = pneg %p145
        %p288 = pneg %p169
        %p289 = pneg %p166
        %p290 = pneg %p190
        %p291 = pneg %p187
        %p292 = pneg %p216
        %p293 = pneg %p213
        %s294 = sand.u32 %s203, 1
        %s295 = scalar_lea.sflag [#allocation4], %s294
        %s296 = sand.u32 %s203, 1
        %s297 = smul.addr %s296, 8
        %s298 = scalar_lea.vmem [#allocation3], %s297
        %p299 = scmp.lt.s32.totalorder %s22, 1
        %s300 = scalar_select %p299, %s22, 1
        %s301 = smul.addr %s300, 2
        %s302 = smul.addr %s301, 4
        %s303 = scalar_lea.vmem %s0, %s302
        %304 = vst [vmem:[#allocation2] sm:$0xf] 0.0
        %305 = vst [vmem:[#allocation2 + $0xc] sm:$0xf] 0.0
        %v306 = vld [vmem:[%s7] ss:$2 sm:$0x3]
        %s307 = scalar_lea.vmem %s7, 1
        %v308 = vld [vmem:[%s307] ss:$2 sm:$0x3]
        %v309 = vld [vmem:[%s303] sm:$0xff]
        %310 = vst [vmem:[#allocation2 + $0x4] sm:$0xff] %v309
        %v311 = vld [vmem:[#allocation2] sm:$0xff]
        %v312 = vld [vmem:[#allocation2 + $0x8] sm:$0xf]
        %v313 = vld [vmem:[%s1] sm:$0xf]
        %s314 = scalar_lea.vmem %s1, 12
        %v315 = vld [vmem:[%s314] sm:$0xf]
        %v318 = vcombine.high %v311, %v311
        %319 = vrot.lane.b32.xlu0 %v311, 1
        %v320 = vpop.permute.xlu0 %319
        %321 = vrot.lane.b32.xlu0 %v318, 1
        %v322 = vpop.permute.xlu0 %321
        %323 = vrot.lane.b32.xlu0 %v312, 1
        %v324 = vpop.permute.xlu0 %323
        %vm325 = vcmask 7168
        %v326 = vsel %vm325, %v320, %v322
        %v327 = vsel %vm325, %v322, %v324
        %vm328 = vcmask 31744
        %v330 = vsel %vm328, %v315, 0
        %vm332 = vcmask 1043456
        %v333 = vsel %vm332, %v326, 0
        %v335 = vsel %vm332, %v327, 0
        %337 = vmatprep.subr.mxu0 0.0
        %338 = vmatpush1.msra.mxu0 0.0
        %339 = vmatprep.subr.mxu0 0.0
        %340 = vmatpush1.msra.mxu0 0.0
        %341 = vmatprep.subr.mxu0 0.0
        %342 = vmatpush1.msra.mxu0 0.0
        %343 = vmatprep.subr.mxu0 0.0
        %344 = vmatpush1.msra.mxu0 0.0
        %345 = vmatprep.subr.mxu0 0.0
        %346 = vmatpush1.msra.mxu0 0.0
        %347 = vmatprep.subr.mxu0 0.0
        %348 = vmatpush1.msra.mxu0 0.0
        %349 = vmatprep.subr.mxu0 0.0
        %350 = vmatpush1.msra.mxu0 0.0
        %351 = vmatprep.subr.mxu0 0.0
        %352 = vmatpush1.msra.mxu0 0.0
        %353 = vmatprep.subr.mxu0 0.0
        %354 = vmatpush1.msra.mxu0 0.0
        %355 = vmatprep.subr.mxu0 0.0
        %356 = vmatpush1.msra.mxu0 0.0
        %357 = vmatprep.subr.mxu0 0.0
        %358 = vmatpush1.msra.mxu0 0.0
        %359 = vmatprep.subr.mxu0 0.0
        %360 = vmatpush1.msra.mxu0 0.0
        %361 = vmatprep.subr.mxu0 0.0
        %362 = vmatpush1.msra.mxu0 0.0
        %363 = vmatprep.subr.mxu0 0.0
        %364 = vmatpush1.msra.mxu0 0.0
        %365 = vmatprep.subr.mxu0 0.0
        %366 = vmatpush1.msra.mxu0 0.0
        %367 = vmatprep.subr.mxu0 %v335
        %368 = vmatpush1.msra.mxu0 %v333
        %369 = vmatprep.subr.mxu0 0.0
        %370 = vmatpush2.msra.mxu0 0.0
        %371 = vmatprep.subr.mxu0 0.0
        %372 = vmatpush2.msra.mxu0 0.0
        %373 = vmatprep.subr.mxu0 0.0
        %374 = vmatpush2.msra.mxu0 0.0
        %375 = vmatprep.subr.mxu0 0.0
        %376 = vmatpush2.msra.mxu0 0.0
        %377 = vmatprep.subr.mxu0 0.0
        %378 = vmatpush2.msra.mxu0 0.0
        %379 = vmatprep.subr.mxu0 0.0
        %380 = vmatpush2.msra.mxu0 0.0
        %381 = vmatprep.subr.mxu0 0.0
        %382 = vmatpush2.msra.mxu0 0.0
        %383 = vmatprep.subr.mxu0 0.0
        %384 = vmatpush2.msra.mxu0 0.0
        %385 = vmatprep.subr.mxu0 0.0
        %386 = vmatpush2.msra.mxu0 0.0
        %387 = vmatprep.subr.mxu0 0.0
        %388 = vmatpush2.msra.mxu0 0.0
        %389 = vmatprep.subr.mxu0 0.0
        %390 = vmatpush2.msra.mxu0 0.0
        %391 = vmatprep.subr.mxu0 0.0
        %392 = vmatpush2.msra.mxu0 0.0
        %393 = vmatprep.subr.mxu0 0.0
        %394 = vmatpush2.msra.mxu0 0.0
        %395 = vmatprep.subr.mxu0 0.0
        %396 = vmatpush2.msra.mxu0 0.0
        %397 = vmatprep.subr.mxu0 0.0
        %398 = vmatpush2.msra.mxu0 0.0
        %399 = vmatprep.subr.mxu0 0.0
        %400 = vmatpush2.msra.mxu0 0.0
        %401 = vmatprep.mubr.f32.mxu0 0.0
        %402 = vmatmul.mubr.f32.gmra.mxu0 %v330
        %v403 = vpop.f32.mrf.mxu0
        %v404 = vadd.f32 0.0, %v403
        %v405 = vpop.f32.mrf.mxu0
        %v406 = vadd.f32 0.0, %v405
        %407 = vdwg.mxu0
        %408 = vrot.lane.b32.xlu0 %v311, 17
        %v409 = vpop.permute.xlu0 %408
        %410 = vrot.lane.b32.xlu0 %v318, 17
        %v411 = vpop.permute.xlu0 %410
        %412 = vrot.lane.b32.xlu0 %v312, 17
        %v413 = vpop.permute.xlu0 %412
        %vm414 = vcmask 138240
        %v415 = vsel %vm414, %v409, %v411
        %v416 = vsel %vm414, %v411, %v413
        %v418 = vsel %vm328, %v313, 0
        %v420 = vsel %vm332, %v415, 0
        %v422 = vsel %vm332, %v416, 0
        %424 = vmatprep.subr.mxu0 0.0
        %425 = vmatpush1.msra.mxu0 0.0
        %426 = vmatprep.subr.mxu0 0.0
        %427 = vmatpush1.msra.mxu0 0.0
        %428 = vmatprep.subr.mxu0 0.0
        %429 = vmatpush1.msra.mxu0 0.0
        %430 = vmatprep.subr.mxu0 0.0
        %431 = vmatpush1.msra.mxu0 0.0
        %432 = vmatprep.subr.mxu0 0.0
        %433 = vmatpush1.msra.mxu0 0.0
        %434 = vmatprep.subr.mxu0 0.0
        %435 = vmatpush1.msra.mxu0 0.0
        %436 = vmatprep.subr.mxu0 0.0
        %437 = vmatpush1.msra.mxu0 0.0
        %438 = vmatprep.subr.mxu0 0.0
        %439 = vmatpush1.msra.mxu0 0.0
        %440 = vmatprep.subr.mxu0 0.0
        %441 = vmatpush1.msra.mxu0 0.0
        %442 = vmatprep.subr.mxu0 0.0
        %443 = vmatpush1.msra.mxu0 0.0
        %444 = vmatprep.subr.mxu0 0.0
        %445 = vmatpush1.msra.mxu0 0.0
        %446 = vmatprep.subr.mxu0 0.0
        %447 = vmatpush1.msra.mxu0 0.0
        %448 = vmatprep.subr.mxu0 0.0
        %449 = vmatpush1.msra.mxu0 0.0
        %450 = vmatprep.subr.mxu0 0.0
        %451 = vmatpush1.msra.mxu0 0.0
        %452 = vmatprep.subr.mxu0 0.0
        %453 = vmatpush1.msra.mxu0 0.0
        %454 = vmatprep.subr.mxu0 %v422
        %455 = vmatpush1.msra.mxu0 %v420
        %456 = vmatprep.subr.mxu0 0.0
        %457 = vmatpush2.msra.mxu0 0.0
        %458 = vmatprep.subr.mxu0 0.0
        %459 = vmatpush2.msra.mxu0 0.0
        %460 = vmatprep.subr.mxu0 0.0
        %461 = vmatpush2.msra.mxu0 0.0
        %462 = vmatprep.subr.mxu0 0.0
        %463 = vmatpush2.msra.mxu0 0.0
        %464 = vmatprep.subr.mxu0 0.0
        %465 = vmatpush2.msra.mxu0 0.0
        %466 = vmatprep.subr.mxu0 0.0
        %467 = vmatpush2.msra.mxu0 0.0
        %468 = vmatprep.subr.mxu0 0.0
        %469 = vmatpush2.msra.mxu0 0.0
        %470 = vmatprep.subr.mxu0 0.0
        %471 = vmatpush2.msra.mxu0 0.0
        %472 = vmatprep.subr.mxu0 0.0
        %473 = vmatpush2.msra.mxu0 0.0
        %474 = vmatprep.subr.mxu0 0.0
        %475 = vmatpush2.msra.mxu0 0.0
        %476 = vmatprep.subr.mxu0 0.0
        %477 = vmatpush2.msra.mxu0 0.0
        %478 = vmatprep.subr.mxu0 0.0
        %479 = vmatpush2.msra.mxu0 0.0
        %480 = vmatprep.subr.mxu0 0.0
        %481 = vmatpush2.msra.mxu0 0.0
        %482 = vmatprep.subr.mxu0 0.0
        %483 = vmatpush2.msra.mxu0 0.0
        %484 = vmatprep.subr.mxu0 0.0
        %485 = vmatpush2.msra.mxu0 0.0
        %486 = vmatprep.subr.mxu0 0.0
        %487 = vmatpush2.msra.mxu0 0.0
        %488 = vmatprep.mubr.f32.mxu0 0.0
        %489 = vmatmul.mubr.f32.gmra.mxu0 %v418
        %v490 = vpop.f32.mrf.mxu0
        %v491 = vadd.f32 %v404, %v490
        %v492 = vpop.f32.mrf.mxu0
        %v493 = vadd.f32 %v406, %v492
        %494 = vdwg.mxu0
        %v495 = vld [vmem:[#allocation2 + $0x4] sm:$0xff]
        %v496 = vld [vmem:[#allocation2 + $0xc] sm:$0xf]
        %s497 = scalar_lea.vmem %s1, 24
        %v498 = vld [vmem:[%s497] sm:$0xf]
        %v501 = vcombine.high %v495, %v495
        %502 = vrot.lane.b32.xlu0 %v495, 113
        %v503 = vpop.permute.xlu0 %502
        %504 = vrot.lane.b32.xlu0 %v501, 113
        %v505 = vpop.permute.xlu0 %504
        %506 = vrot.lane.b32.xlu0 %v496, 113
        %v507 = vpop.permute.xlu0 %506
        %vm508 = vcmask 924672
        %v509 = vsel %vm508, %v503, %v505
        %v510 = vsel %vm508, %v505, %v507
        %v512 = vsel %vm328, %v498, 0
        %v514 = vsel %vm332, %v509, 0
        %v516 = vsel %vm332, %v510, 0
        %518 = vmatprep.subr.mxu0 0.0
        %519 = vmatpush1.msra.mxu0 0.0
        %520 = vmatprep.subr.mxu0 0.0
        %521 = vmatpush1.msra.mxu0 0.0
        %522 = vmatprep.subr.mxu0 0.0
        %523 = vmatpush1.msra.mxu0 0.0
        %524 = vmatprep.subr.mxu0 0.0
        %525 = vmatpush1.msra.mxu0 0.0
        %526 = vmatprep.subr.mxu0 0.0
        %527 = vmatpush1.msra.mxu0 0.0
        %528 = vmatprep.subr.mxu0 0.0
        %529 = vmatpush1.msra.mxu0 0.0
        %530 = vmatprep.subr.mxu0 0.0
        %531 = vmatpush1.msra.mxu0 0.0
        %532 = vmatprep.subr.mxu0 0.0
        %533 = vmatpush1.msra.mxu0 0.0
        %534 = vmatprep.subr.mxu0 0.0
        %535 = vmatpush1.msra.mxu0 0.0
        %536 = vmatprep.subr.mxu0 0.0
        %537 = vmatpush1.msra.mxu0 0.0
        %538 = vmatprep.subr.mxu0 0.0
        %539 = vmatpush1.msra.mxu0 0.0
        %540 = vmatprep.subr.mxu0 0.0
        %541 = vmatpush1.msra.mxu0 0.0
        %542 = vmatprep.subr.mxu0 0.0
        %543 = vmatpush1.msra.mxu0 0.0
        %544 = vmatprep.subr.mxu0 0.0
        %545 = vmatpush1.msra.mxu0 0.0
        %546 = vmatprep.subr.mxu0 0.0
        %547 = vmatpush1.msra.mxu0 0.0
        %548 = vmatprep.subr.mxu0 %v516
        %549 = vmatpush1.msra.mxu0 %v514
        %550 = vmatprep.subr.mxu0 0.0
        %551 = vmatpush2.msra.mxu0 0.0
        %552 = vmatprep.subr.mxu0 0.0
        %553 = vmatpush2.msra.mxu0 0.0
        %554 = vmatprep.subr.mxu0 0.0
        %555 = vmatpush2.msra.mxu0 0.0
        %556 = vmatprep.subr.mxu0 0.0
        %557 = vmatpush2.msra.mxu0 0.0
        %558 = vmatprep.subr.mxu0 0.0
        %559 = vmatpush2.msra.mxu0 0.0
        %560 = vmatprep.subr.mxu0 0.0
        %561 = vmatpush2.msra.mxu0 0.0
        %562 = vmatprep.subr.mxu0 0.0
        %563 = vmatpush2.msra.mxu0 0.0
        %564 = vmatprep.subr.mxu0 0.0
        %565 = vmatpush2.msra.mxu0 0.0
        %566 = vmatprep.subr.mxu0 0.0
        %567 = vmatpush2.msra.mxu0 0.0
        %568 = vmatprep.subr.mxu0 0.0
        %569 = vmatpush2.msra.mxu0 0.0
        %570 = vmatprep.subr.mxu0 0.0
        %571 = vmatpush2.msra.mxu0 0.0
        %572 = vmatprep.subr.mxu0 0.0
        %573 = vmatpush2.msra.mxu0 0.0
        %574 = vmatprep.subr.mxu0 0.0
        %575 = vmatpush2.msra.mxu0 0.0
        %576 = vmatprep.subr.mxu0 0.0
        %577 = vmatpush2.msra.mxu0 0.0
        %578 = vmatprep.subr.mxu0 0.0
        %579 = vmatpush2.msra.mxu0 0.0
        %580 = vmatprep.subr.mxu0 0.0
        %581 = vmatpush2.msra.mxu0 0.0
        %582 = vmatprep.mubr.f32.mxu0 0.0
        %583 = vmatmul.mubr.f32.gmra.mxu0 %v512
        %v584 = vpop.f32.mrf.mxu0
        %v585 = vadd.f32 0.0, %v584
        %v586 = vpop.f32.mrf.mxu0
        %v587 = vadd.f32 0.0, %v586
        %588 = vdwg.mxu0
        %v589 = vadd.f32 %v491, %v585
        %v590 = vadd.f32 %v493, %v587
        %v591 = vld [vmem:[#allocation2] sm:$0xff]
        %v592 = vld [vmem:[#allocation2 + $0x8] sm:$0xf]
        %s593 = scalar_lea.vmem %s1, 4
        %v594 = vld [vmem:[%s593] sm:$0xf]
        %v595 = vld [vmem:[#allocation2 + $0x4] sm:$0xff]
        %s596 = scalar_lea.vmem %s1, 16
        %v597 = vld [vmem:[%s596] sm:$0xf]
        %v599 = vcombine.high %v595, %v595
        %v601 = vsel %vm328, %v597, 0
        %v603 = vsel %vm332, %v595, 0
        %v605 = vsel %vm332, %v599, 0
        %607 = vmatprep.subr.mxu0 0.0
        %608 = vmatpush1.msra.mxu0 0.0
        %609 = vmatprep.subr.mxu0 0.0
        %610 = vmatpush1.msra.mxu0 0.0
        %611 = vmatprep.subr.mxu0 0.0
        %612 = vmatpush1.msra.mxu0 0.0
        %613 = vmatprep.subr.mxu0 0.0
        %614 = vmatpush1.msra.mxu0 0.0
        %615 = vmatprep.subr.mxu0 0.0
        %616 = vmatpush1.msra.mxu0 0.0
        %617 = vmatprep.subr.mxu0 0.0
        %618 = vmatpush1.msra.mxu0 0.0
        %619 = vmatprep.subr.mxu0 0.0
        %620 = vmatpush1.msra.mxu0 0.0
        %621 = vmatprep.subr.mxu0 0.0
        %622 = vmatpush1.msra.mxu0 0.0
        %623 = vmatprep.subr.mxu0 0.0
        %624 = vmatpush1.msra.mxu0 0.0
        %625 = vmatprep.subr.mxu0 0.0
        %626 = vmatpush1.msra.mxu0 0.0
        %627 = vmatprep.subr.mxu0 0.0
        %628 = vmatpush1.msra.mxu0 0.0
        %629 = vmatprep.subr.mxu0 0.0
        %630 = vmatpush1.msra.mxu0 0.0
        %631 = vmatprep.subr.mxu0 0.0
        %632 = vmatpush1.msra.mxu0 0.0
        %633 = vmatprep.subr.mxu0 0.0
        %634 = vmatpush1.msra.mxu0 0.0
        %635 = vmatprep.subr.mxu0 0.0
        %636 = vmatpush1.msra.mxu0 0.0
        %637 = vmatprep.subr.mxu0 %v605
        %638 = vmatpush1.msra.mxu0 %v603
        %639 = vmatprep.subr.mxu0 0.0
        %640 = vmatpush2.msra.mxu0 0.0
        %641 = vmatprep.subr.mxu0 0.0
        %642 = vmatpush2.msra.mxu0 0.0
        %643 = vmatprep.subr.mxu0 0.0
        %644 = vmatpush2.msra.mxu0 0.0
        %645 = vmatprep.subr.mxu0 0.0
        %646 = vmatpush2.msra.mxu0 0.0
        %647 = vmatprep.subr.mxu0 0.0
        %648 = vmatpush2.msra.mxu0 0.0
        %649 = vmatprep.subr.mxu0 0.0
        %650 = vmatpush2.msra.mxu0 0.0
        %651 = vmatprep.subr.mxu0 0.0
        %652 = vmatpush2.msra.mxu0 0.0
        %653 = vmatprep.subr.mxu0 0.0
        %654 = vmatpush2.msra.mxu0 0.0
        %655 = vmatprep.subr.mxu0 0.0
        %656 = vmatpush2.msra.mxu0 0.0
        %657 = vmatprep.subr.mxu0 0.0
        %658 = vmatpush2.msra.mxu0 0.0
        %659 = vmatprep.subr.mxu0 0.0
        %660 = vmatpush2.msra.mxu0 0.0
        %661 = vmatprep.subr.mxu0 0.0
        %662 = vmatpush2.msra.mxu0 0.0
        %663 = vmatprep.subr.mxu0 0.0
        %664 = vmatpush2.msra.mxu0 0.0
        %665 = vmatprep.subr.mxu0 0.0
        %666 = vmatpush2.msra.mxu0 0.0
        %667 = vmatprep.subr.mxu0 0.0
        %668 = vmatpush2.msra.mxu0 0.0
        %669 = vmatprep.subr.mxu0 0.0
        %670 = vmatpush2.msra.mxu0 0.0
        %671 = vmatprep.mubr.f32.mxu0 0.0
        %672 = vmatmul.mubr.f32.gmra.mxu0 %v601
        %v673 = vpop.f32.mrf.mxu0
        %v674 = vadd.f32 0.0, %v673
        %v675 = vpop.f32.mrf.mxu0
        %v676 = vadd.f32 0.0, %v675
        %677 = vdwg.mxu0
        %v680 = vcombine.high %v591, %v591
        %681 = vrot.lane.b32.xlu0 %v591, 16
        %v682 = vpop.permute.xlu0 %681
        %683 = vrot.lane.b32.xlu0 %v680, 16
        %v684 = vpop.permute.xlu0 %683
        %685 = vrot.lane.b32.xlu0 %v592, 16
        %v686 = vpop.permute.xlu0 %685
        %vm687 = vcmask 130048
        %v688 = vsel %vm687, %v682, %v684
        %v689 = vsel %vm687, %v684, %v686
        %v691 = vsel %vm328, %v594, 0
        %v693 = vsel %vm332, %v688, 0
        %v695 = vsel %vm332, %v689, 0
        %697 = vmatprep.subr.mxu0 0.0
        %698 = vmatpush1.msra.mxu0 0.0
        %699 = vmatprep.subr.mxu0 0.0
        %700 = vmatpush1.msra.mxu0 0.0
        %701 = vmatprep.subr.mxu0 0.0
        %702 = vmatpush1.msra.mxu0 0.0
        %703 = vmatprep.subr.mxu0 0.0
        %704 = vmatpush1.msra.mxu0 0.0
        %705 = vmatprep.subr.mxu0 0.0
        %706 = vmatpush1.msra.mxu0 0.0
        %707 = vmatprep.subr.mxu0 0.0
        %708 = vmatpush1.msra.mxu0 0.0
        %709 = vmatprep.subr.mxu0 0.0
        %710 = vmatpush1.msra.mxu0 0.0
        %711 = vmatprep.subr.mxu0 0.0
        %712 = vmatpush1.msra.mxu0 0.0
        %713 = vmatprep.subr.mxu0 0.0
        %714 = vmatpush1.msra.mxu0 0.0
        %715 = vmatprep.subr.mxu0 0.0
        %716 = vmatpush1.msra.mxu0 0.0
        %717 = vmatprep.subr.mxu0 0.0
        %718 = vmatpush1.msra.mxu0 0.0
        %719 = vmatprep.subr.mxu0 0.0
        %720 = vmatpush1.msra.mxu0 0.0
        %721 = vmatprep.subr.mxu0 0.0
        %722 = vmatpush1.msra.mxu0 0.0
        %723 = vmatprep.subr.mxu0 0.0
        %724 = vmatpush1.msra.mxu0 0.0
        %725 = vmatprep.subr.mxu0 0.0
        %726 = vmatpush1.msra.mxu0 0.0
        %727 = vmatprep.subr.mxu0 %v695
        %728 = vmatpush1.msra.mxu0 %v693
        %729 = vmatprep.subr.mxu0 0.0
        %730 = vmatpush2.msra.mxu0 0.0
        %731 = vmatprep.subr.mxu0 0.0
        %732 = vmatpush2.msra.mxu0 0.0
        %733 = vmatprep.subr.mxu0 0.0
        %734 = vmatpush2.msra.mxu0 0.0
        %735 = vmatprep.subr.mxu0 0.0
        %736 = vmatpush2.msra.mxu0 0.0
        %737 = vmatprep.subr.mxu0 0.0
        %738 = vmatpush2.msra.mxu0 0.0
        %739 = vmatprep.subr.mxu0 0.0
        %740 = vmatpush2.msra.mxu0 0.0
        %741 = vmatprep.subr.mxu0 0.0
        %742 = vmatpush2.msra.mxu0 0.0
        %743 = vmatprep.subr.mxu0 0.0
        %744 = vmatpush2.msra.mxu0 0.0
        %745 = vmatprep.subr.mxu0 0.0
        %746 = vmatpush2.msra.mxu0 0.0
        %747 = vmatprep.subr.mxu0 0.0
        %748 = vmatpush2.msra.mxu0 0.0
        %749 = vmatprep.subr.mxu0 0.0
        %750 = vmatpush2.msra.mxu0 0.0
        %751 = vmatprep.subr.mxu0 0.0
        %752 = vmatpush2.msra.mxu0 0.0
        %753 = vmatprep.subr.mxu0 0.0
        %754 = vmatpush2.msra.mxu0 0.0
        %755 = vmatprep.subr.mxu0 0.0
        %756 = vmatpush2.msra.mxu0 0.0
        %757 = vmatprep.subr.mxu0 0.0
        %758 = vmatpush2.msra.mxu0 0.0
        %759 = vmatprep.subr.mxu0 0.0
        %760 = vmatpush2.msra.mxu0 0.0
        %761 = vmatprep.mubr.f32.mxu0 0.0
        %762 = vmatmul.mubr.f32.gmra.mxu0 %v691
        %v763 = vpop.f32.mrf.mxu0
        %v764 = vadd.f32 %v674, %v763
        %v765 = vpop.f32.mrf.mxu0
        %v766 = vadd.f32 %v676, %v765
        %767 = vdwg.mxu0
        %v768 = vld [vmem:[#allocation2 + $0x4] sm:$0xff]
        %v769 = vld [vmem:[#allocation2 + $0xc] sm:$0xf]
        %s770 = scalar_lea.vmem %s1, 28
        %v771 = vld [vmem:[%s770] sm:$0xf]
        %v774 = vcombine.high %v768, %v768
        %775 = vrot.lane.b32.xlu0 %v768, 112
        %v776 = vpop.permute.xlu0 %775
        %777 = vrot.lane.b32.xlu0 %v774, 112
        %v778 = vpop.permute.xlu0 %777
        %779 = vrot.lane.b32.xlu0 %v769, 112
        %v780 = vpop.permute.xlu0 %779
        %vm781 = vcmask 916480
        %v782 = vsel %vm781, %v776, %v778
        %v783 = vsel %vm781, %v778, %v780
        %v785 = vsel %vm328, %v771, 0
        %v787 = vsel %vm332, %v782, 0
        %v789 = vsel %vm332, %v783, 0
        %791 = vmatprep.subr.mxu0 0.0
        %792 = vmatpush1.msra.mxu0 0.0
        %793 = vmatprep.subr.mxu0 0.0
        %794 = vmatpush1.msra.mxu0 0.0
        %795 = vmatprep.subr.mxu0 0.0
        %796 = vmatpush1.msra.mxu0 0.0
        %797 = vmatprep.subr.mxu0 0.0
        %798 = vmatpush1.msra.mxu0 0.0
        %799 = vmatprep.subr.mxu0 0.0
        %800 = vmatpush1.msra.mxu0 0.0
        %801 = vmatprep.subr.mxu0 0.0
        %802 = vmatpush1.msra.mxu0 0.0
        %803 = vmatprep.subr.mxu0 0.0
        %804 = vmatpush1.msra.mxu0 0.0
        %805 = vmatprep.subr.mxu0 0.0
        %806 = vmatpush1.msra.mxu0 0.0
        %807 = vmatprep.subr.mxu0 0.0
        %808 = vmatpush1.msra.mxu0 0.0
        %809 = vmatprep.subr.mxu0 0.0
        %810 = vmatpush1.msra.mxu0 0.0
        %811 = vmatprep.subr.mxu0 0.0
        %812 = vmatpush1.msra.mxu0 0.0
        %813 = vmatprep.subr.mxu0 0.0
        %814 = vmatpush1.msra.mxu0 0.0
        %815 = vmatprep.subr.mxu0 0.0
        %816 = vmatpush1.msra.mxu0 0.0
        %817 = vmatprep.subr.mxu0 0.0
        %818 = vmatpush1.msra.mxu0 0.0
        %819 = vmatprep.subr.mxu0 0.0
        %820 = vmatpush1.msra.mxu0 0.0
        %821 = vmatprep.subr.mxu0 %v789
        %822 = vmatpush1.msra.mxu0 %v787
        %823 = vmatprep.subr.mxu0 0.0
        %824 = vmatpush2.msra.mxu0 0.0
        %825 = vmatprep.subr.mxu0 0.0
        %826 = vmatpush2.msra.mxu0 0.0
        %827 = vmatprep.subr.mxu0 0.0
        %828 = vmatpush2.msra.mxu0 0.0
        %829 = vmatprep.subr.mxu0 0.0
        %830 = vmatpush2.msra.mxu0 0.0
        %831 = vmatprep.subr.mxu0 0.0
        %832 = vmatpush2.msra.mxu0 0.0
        %833 = vmatprep.subr.mxu0 0.0
        %834 = vmatpush2.msra.mxu0 0.0
        %835 = vmatprep.subr.mxu0 0.0
        %836 = vmatpush2.msra.mxu0 0.0
        %837 = vmatprep.subr.mxu0 0.0
        %838 = vmatpush2.msra.mxu0 0.0
        %839 = vmatprep.subr.mxu0 0.0
        %840 = vmatpush2.msra.mxu0 0.0
        %841 = vmatprep.subr.mxu0 0.0
        %842 = vmatpush2.msra.mxu0 0.0
        %843 = vmatprep.subr.mxu0 0.0
        %844 = vmatpush2.msra.mxu0 0.0
        %845 = vmatprep.subr.mxu0 0.0
        %846 = vmatpush2.msra.mxu0 0.0
        %847 = vmatprep.subr.mxu0 0.0
        %848 = vmatpush2.msra.mxu0 0.0
        %849 = vmatprep.subr.mxu0 0.0
        %850 = vmatpush2.msra.mxu0 0.0
        %851 = vmatprep.subr.mxu0 0.0
        %852 = vmatpush2.msra.mxu0 0.0
        %853 = vmatprep.subr.mxu0 0.0
        %854 = vmatpush2.msra.mxu0 0.0
        %855 = vmatprep.mubr.f32.mxu0 0.0
        %856 = vmatmul.mubr.f32.gmra.mxu0 %v785
        %v857 = vpop.f32.mrf.mxu0
        %v858 = vadd.f32 0.0, %v857
        %v859 = vpop.f32.mrf.mxu0
        %v860 = vadd.f32 0.0, %v859
        %861 = vdwg.mxu0
        %v862 = vadd.f32 %v764, %v858
        %v863 = vadd.f32 %v766, %v860
        %v864 = vld [vmem:[#allocation2] sm:$0xff]
        %v865 = vld [vmem:[#allocation2 + $0x8] sm:$0xf]
        %s866 = scalar_lea.vmem %s1, 8
        %v867 = vld [vmem:[%s866] sm:$0xf]
        %v868 = vld [vmem:[#allocation2 + $0x4] sm:$0xff]
        %v869 = vld [vmem:[#allocation2 + $0xc] sm:$0xf]
        %s870 = scalar_lea.vmem %s1, 20
        %v871 = vld [vmem:[%s870] sm:$0xf]
        %v874 = vcombine.high %v868, %v868
        %875 = vrot.lane.b32.xlu0 %v868, 127
        %v876 = vpop.permute.xlu0 %875
        %877 = vrot.lane.b32.xlu0 %v874, 127
        %v878 = vpop.permute.xlu0 %877
        %879 = vrot.lane.b32.xlu0 %v869, 127
        %v880 = vpop.permute.xlu0 %879
        %vm881 = vcmask 1039360
        %v882 = vsel %vm881, %v876, %v878
        %v883 = vsel %vm881, %v878, %v880
        %v885 = vsel %vm328, %v871, 0
        %v887 = vsel %vm332, %v882, 0
        %v889 = vsel %vm332, %v883, 0
        %891 = vmatprep.subr.mxu0 0.0
        %892 = vmatpush1.msra.mxu0 0.0
        %893 = vmatprep.subr.mxu0 0.0
        %894 = vmatpush1.msra.mxu0 0.0
        %895 = vmatprep.subr.mxu0 0.0
        %896 = vmatpush1.msra.mxu0 0.0
        %897 = vmatprep.subr.mxu0 0.0
        %898 = vmatpush1.msra.mxu0 0.0
        %899 = vmatprep.subr.mxu0 0.0
        %900 = vmatpush1.msra.mxu0 0.0
        %901 = vmatprep.subr.mxu0 0.0
        %902 = vmatpush1.msra.mxu0 0.0
        %903 = vmatprep.subr.mxu0 0.0
        %904 = vmatpush1.msra.mxu0 0.0
        %905 = vmatprep.subr.mxu0 0.0
        %906 = vmatpush1.msra.mxu0 0.0
        %907 = vmatprep.subr.mxu0 0.0
        %908 = vmatpush1.msra.mxu0 0.0
        %909 = vmatprep.subr.mxu0 0.0
        %910 = vmatpush1.msra.mxu0 0.0
        %911 = vmatprep.subr.mxu0 0.0
        %912 = vmatpush1.msra.mxu0 0.0
        %913 = vmatprep.subr.mxu0 0.0
        %914 = vmatpush1.msra.mxu0 0.0
        %915 = vmatprep.subr.mxu0 0.0
        %916 = vmatpush1.msra.mxu0 0.0
        %917 = vmatprep.subr.mxu0 0.0
        %918 = vmatpush1.msra.mxu0 0.0
        %919 = vmatprep.subr.mxu0 0.0
        %920 = vmatpush1.msra.mxu0 0.0
        %921 = vmatprep.subr.mxu0 %v889
        %922 = vmatpush1.msra.mxu0 %v887
        %923 = vmatprep.subr.mxu0 0.0
        %924 = vmatpush2.msra.mxu0 0.0
        %925 = vmatprep.subr.mxu0 0.0
        %926 = vmatpush2.msra.mxu0 0.0
        %927 = vmatprep.subr.mxu0 0.0
        %928 = vmatpush2.msra.mxu0 0.0
        %929 = vmatprep.subr.mxu0 0.0
        %930 = vmatpush2.msra.mxu0 0.0
        %931 = vmatprep.subr.mxu0 0.0
        %932 = vmatpush2.msra.mxu0 0.0
        %933 = vmatprep.subr.mxu0 0.0
        %934 = vmatpush2.msra.mxu0 0.0
        %935 = vmatprep.subr.mxu0 0.0
        %936 = vmatpush2.msra.mxu0 0.0
        %937 = vmatprep.subr.mxu0 0.0
        %938 = vmatpush2.msra.mxu0 0.0
        %939 = vmatprep.subr.mxu0 0.0
        %940 = vmatpush2.msra.mxu0 0.0
        %941 = vmatprep.subr.mxu0 0.0
        %942 = vmatpush2.msra.mxu0 0.0
        %943 = vmatprep.subr.mxu0 0.0
        %944 = vmatpush2.msra.mxu0 0.0
        %945 = vmatprep.subr.mxu0 0.0
        %946 = vmatpush2.msra.mxu0 0.0
        %947 = vmatprep.subr.mxu0 0.0
        %948 = vmatpush2.msra.mxu0 0.0
        %949 = vmatprep.subr.mxu0 0.0
        %950 = vmatpush2.msra.mxu0 0.0
        %951 = vmatprep.subr.mxu0 0.0
        %952 = vmatpush2.msra.mxu0 0.0
        %953 = vmatprep.subr.mxu0 0.0
        %954 = vmatpush2.msra.mxu0 0.0
        %955 = vmatprep.mubr.f32.mxu0 0.0
        %956 = vmatmul.mubr.f32.gmra.mxu0 %v885
        %v957 = vpop.f32.mrf.mxu0
        %v958 = vadd.f32 0.0, %v957
        %v959 = vpop.f32.mrf.mxu0
        %v960 = vadd.f32 0.0, %v959
        %961 = vdwg.mxu0
        %v964 = vcombine.high %v864, %v864
        %965 = vrot.lane.b32.xlu0 %v864, 15
        %v966 = vpop.permute.xlu0 %965
        %967 = vrot.lane.b32.xlu0 %v964, 15
        %v968 = vpop.permute.xlu0 %967
        %969 = vrot.lane.b32.xlu0 %v865, 15
        %v970 = vpop.permute.xlu0 %969
        %vm971 = vcmask 121856
        %v972 = vsel %vm971, %v966, %v968
        %v973 = vsel %vm971, %v968, %v970
        %v975 = vsel %vm328, %v867, 0
        %v977 = vsel %vm332, %v972, 0
        %v979 = vsel %vm332, %v973, 0
        %981 = vmatprep.subr.mxu0 0.0
        %982 = vmatpush1.msra.mxu0 0.0
        %983 = vmatprep.subr.mxu0 0.0
        %984 = vmatpush1.msra.mxu0 0.0
        %985 = vmatprep.subr.mxu0 0.0
        %986 = vmatpush1.msra.mxu0 0.0
        %987 = vmatprep.subr.mxu0 0.0
        %988 = vmatpush1.msra.mxu0 0.0
        %989 = vmatprep.subr.mxu0 0.0
        %990 = vmatpush1.msra.mxu0 0.0
        %991 = vmatprep.subr.mxu0 0.0
        %992 = vmatpush1.msra.mxu0 0.0
        %993 = vmatprep.subr.mxu0 0.0
        %994 = vmatpush1.msra.mxu0 0.0
        %995 = vmatprep.subr.mxu0 0.0
        %996 = vmatpush1.msra.mxu0 0.0
        %997 = vmatprep.subr.mxu0 0.0
        %998 = vmatpush1.msra.mxu0 0.0
        %999 = vmatprep.subr.mxu0 0.0
        %1000 = vmatpush1.msra.mxu0 0.0
        %1001 = vmatprep.subr.mxu0 0.0
        %1002 = vmatpush1.msra.mxu0 0.0
        %1003 = vmatprep.subr.mxu0 0.0
        %1004 = vmatpush1.msra.mxu0 0.0
        %1005 = vmatprep.subr.mxu0 0.0
        %1006 = vmatpush1.msra.mxu0 0.0
        %1007 = vmatprep.subr.mxu0 0.0
        %1008 = vmatpush1.msra.mxu0 0.0
        %1009 = vmatprep.subr.mxu0 0.0
        %1010 = vmatpush1.msra.mxu0 0.0
        %1011 = vmatprep.subr.mxu0 %v979
        %1012 = vmatpush1.msra.mxu0 %v977
        %1013 = vmatprep.subr.mxu0 0.0
        %1014 = vmatpush2.msra.mxu0 0.0
        %1015 = vmatprep.subr.mxu0 0.0
        %1016 = vmatpush2.msra.mxu0 0.0
        %1017 = vmatprep.subr.mxu0 0.0
        %1018 = vmatpush2.msra.mxu0 0.0
        %1019 = vmatprep.subr.mxu0 0.0
        %1020 = vmatpush2.msra.mxu0 0.0
        %1021 = vmatprep.subr.mxu0 0.0
        %1022 = vmatpush2.msra.mxu0 0.0
        %1023 = vmatprep.subr.mxu0 0.0
        %1024 = vmatpush2.msra.mxu0 0.0
        %1025 = vmatprep.subr.mxu0 0.0
        %1026 = vmatpush2.msra.mxu0 0.0
        %1027 = vmatprep.subr.mxu0 0.0
        %1028 = vmatpush2.msra.mxu0 0.0
        %1029 = vmatprep.subr.mxu0 0.0
        %1030 = vmatpush2.msra.mxu0 0.0
        %1031 = vmatprep.subr.mxu0 0.0
        %1032 = vmatpush2.msra.mxu0 0.0
        %1033 = vmatprep.subr.mxu0 0.0
        %1034 = vmatpush2.msra.mxu0 0.0
        %1035 = vmatprep.subr.mxu0 0.0
        %1036 = vmatpush2.msra.mxu0 0.0
        %1037 = vmatprep.subr.mxu0 0.0
        %1038 = vmatpush2.msra.mxu0 0.0
        %1039 = vmatprep.subr.mxu0 0.0
        %1040 = vmatpush2.msra.mxu0 0.0
        %1041 = vmatprep.subr.mxu0 0.0
        %1042 = vmatpush2.msra.mxu0 0.0
        %1043 = vmatprep.subr.mxu0 0.0
        %1044 = vmatpush2.msra.mxu0 0.0
        %1045 = vmatprep.mubr.f32.mxu0 0.0
        %1046 = vmatmul.mubr.f32.gmra.mxu0 %v975
        %v1047 = vpop.f32.mrf.mxu0
        %v1048 = vadd.f32 %v958, %v1047
        %v1049 = vpop.f32.mrf.mxu0
        %v1050 = vadd.f32 %v960, %v1049
        %1051 = vdwg.mxu0
        %v1052 = vld [vmem:[#allocation2 + $0x4] sm:$0xff]
        %v1053 = vld [vmem:[#allocation2 + $0xc] sm:$0xf]
        %s1054 = scalar_lea.vmem %s1, 32
        %v1055 = vld [vmem:[%s1054] sm:$0xf]
        %v1058 = vcombine.high %v1052, %v1052
        %1059 = vrot.lane.b32.xlu0 %v1052, 111
        %v1060 = vpop.permute.xlu0 %1059
        %1061 = vrot.lane.b32.xlu0 %v1058, 111
        %v1062 = vpop.permute.xlu0 %1061
        %1063 = vrot.lane.b32.xlu0 %v1053, 111
        %v1064 = vpop.permute.xlu0 %1063
        %vm1065 = vcmask 908288
        %v1066 = vsel %vm1065, %v1060, %v1062
        %v1067 = vsel %vm1065, %v1062, %v1064
        %v1069 = vsel %vm328, %v1055, 0
        %v1071 = vsel %vm332, %v1066, 0
        %v1073 = vsel %vm332, %v1067, 0
        %1075 = vmatprep.subr.mxu0 0.0
        %1076 = vmatpush1.msra.mxu0 0.0
        %1077 = vmatprep.subr.mxu0 0.0
        %1078 = vmatpush1.msra.mxu0 0.0
        %1079 = vmatprep.subr.mxu0 0.0
        %1080 = vmatpush1.msra.mxu0 0.0
        %1081 = vmatprep.subr.mxu0 0.0
        %1082 = vmatpush1.msra.mxu0 0.0
        %1083 = vmatprep.subr.mxu0 0.0
        %1084 = vmatpush1.msra.mxu0 0.0
        %1085 = vmatprep.subr.mxu0 0.0
        %1086 = vmatpush1.msra.mxu0 0.0
        %1087 = vmatprep.subr.mxu0 0.0
        %1088 = vmatpush1.msra.mxu0 0.0
        %1089 = vmatprep.subr.mxu0 0.0
        %1090 = vmatpush1.msra.mxu0 0.0
        %1091 = vmatprep.subr.mxu0 0.0
        %1092 = vmatpush1.msra.mxu0 0.0
        %1093 = vmatprep.subr.mxu0 0.0
        %1094 = vmatpush1.msra.mxu0 0.0
        %1095 = vmatprep.subr.mxu0 0.0
        %1096 = vmatpush1.msra.mxu0 0.0
        %1097 = vmatprep.subr.mxu0 0.0
        %1098 = vmatpush1.msra.mxu0 0.0
        %1099 = vmatprep.subr.mxu0 0.0
        %1100 = vmatpush1.msra.mxu0 0.0
        %1101 = vmatprep.subr.mxu0 0.0
        %1102 = vmatpush1.msra.mxu0 0.0
        %1103 = vmatprep.subr.mxu0 0.0
        %1104 = vmatpush1.msra.mxu0 0.0
        %1105 = vmatprep.subr.mxu0 %v1073
        %1106 = vmatpush1.msra.mxu0 %v1071
        %1107 = vmatprep.subr.mxu0 0.0
        %1108 = vmatpush2.msra.mxu0 0.0
        %1109 = vmatprep.subr.mxu0 0.0
        %1110 = vmatpush2.msra.mxu0 0.0
        %1111 = vmatprep.subr.mxu0 0.0
        %1112 = vmatpush2.msra.mxu0 0.0
        %1113 = vmatprep.subr.mxu0 0.0
        %1114 = vmatpush2.msra.mxu0 0.0
        %1115 = vmatprep.subr.mxu0 0.0
        %1116 = vmatpush2.msra.mxu0 0.0
        %1117 = vmatprep.subr.mxu0 0.0
        %1118 = vmatpush2.msra.mxu0 0.0
        %1119 = vmatprep.subr.mxu0 0.0
        %1120 = vmatpush2.msra.mxu0 0.0
        %1121 = vmatprep.subr.mxu0 0.0
        %1122 = vmatpush2.msra.mxu0 0.0
        %1123 = vmatprep.subr.mxu0 0.0
        %1124 = vmatpush2.msra.mxu0 0.0
        %1125 = vmatprep.subr.mxu0 0.0
        %1126 = vmatpush2.msra.mxu0 0.0
        %1127 = vmatprep.subr.mxu0 0.0
        %1128 = vmatpush2.msra.mxu0 0.0
        %1129 = vmatprep.subr.mxu0 0.0
        %1130 = vmatpush2.msra.mxu0 0.0
        %1131 = vmatprep.subr.mxu0 0.0
        %1132 = vmatpush2.msra.mxu0 0.0
        %1133 = vmatprep.subr.mxu0 0.0
        %1134 = vmatpush2.msra.mxu0 0.0
        %1135 = vmatprep.subr.mxu0 0.0
        %1136 = vmatpush2.msra.mxu0 0.0
        %1137 = vmatprep.subr.mxu0 0.0
        %1138 = vmatpush2.msra.mxu0 0.0
        %1139 = vmatprep.mubr.f32.mxu0 0.0
        %1140 = vmatmul.mubr.f32.gmra.mxu0 %v1069
        %v1141 = vpop.f32.mrf.mxu0
        %v1142 = vadd.f32 0.0, %v1141
        %v1143 = vpop.f32.mrf.mxu0
        %v1144 = vadd.f32 0.0, %v1143
        %1145 = vdwg.mxu0
        %v1146 = vadd.f32 %v1048, %v1142
        %v1147 = vadd.f32 %v1050, %v1144
        %v1149 = vlaneseq
        %v1150 = vshrl.u32 %v1149, 7
        %v1151 = vsub.s32 0, %v1150
        %v1152 = vrot.slane %v306, %v1151
        %v1153 = vlaneseq
        %v1154 = vshrl.u32 %v1153, 7
        %v1155 = vsub.s32 1, %v1154
        %v1156 = vrot.slane %v306, %v1155
        %v1159 = vmul.f32 %v589, %v1152
        %v1160 = vmul.f32 %v590, %v1156
        %v1161 = vadd.f32 %v1159, %v862
        %v1162 = vadd.f32 %v1160, %v863
        %v1164 = vlaneseq
        %v1165 = vshrl.u32 %v1164, 7
        %v1166 = vsub.s32 0, %v1165
        %v1167 = vrot.slane %v308, %v1166
        %v1168 = vlaneseq
        %v1169 = vshrl.u32 %v1168, 7
        %v1170 = vsub.s32 1, %v1169
        %v1171 = vrot.slane %v308, %v1170
        %v1174 = vmul.f32 %v1146, %v1167
        %v1175 = vmul.f32 %v1147, %v1171
        %v1176 = vadd.f32 %v1161, %v1174
        %v1177 = vadd.f32 %v1162, %v1175
        %v1178 = vld [vmem:[%s2] sm:$0xf]
        %1180 = vset.pattern.permute.xlu0 0
        %1181 = vperm.xlu0 %1180, %v1178
        %v1182 = vpop.permute.xlu0 %1181
        %v1184 = vadd.f32 %v1176, %v1182
        %v1185 = vadd.f32 %v1177, %v1182
        %v1186 = vmax.f32 %v1184, 0.0
        %v1187 = vmax.f32 %v1185, 0.0
        %v1190 = vcombine.low %v1186, %v1187
        %1192 = vst [vmem:[#allocation2 + $0x4] sm:$0xff] %v1190
        %v1193 = vld [vmem:[#allocation2] sm:$0xff]
        %v1194 = vld [vmem:[#allocation2 + $0x8] sm:$0xf]
        %v1195 = vld [vmem:[%s3] sm:$0xf]
        %s1196 = scalar_lea.vmem %s3, 12
        %v1197 = vld [vmem:[%s1196] sm:$0xf]
        %v1200 = vcombine.high %v1193, %v1193
        %1201 = vrot.lane.b32.xlu0 %v1193, 1
        %v1202 = vpop.permute.xlu0 %1201
        %1203 = vrot.lane.b32.xlu0 %v1200, 1
        %v1204 = vpop.permute.xlu0 %1203
        %1205 = vrot.lane.b32.xlu0 %v1194, 1
        %v1206 = vpop.permute.xlu0 %1205
        %v1207 = vsel %vm325, %v1202, %v1204
        %v1208 = vsel %vm325, %v1204, %v1206
        %v1210 = vsel %vm328, %v1197, 0
        %v1212 = vsel %vm332, %v1207, 0
        %v1214 = vsel %vm332, %v1208, 0
        %1216 = vmatprep.subr.mxu0 0.0
        %1217 = vmatpush1.msra.mxu0 0.0
        %1218 = vmatprep.subr.mxu0 0.0
        %1219 = vmatpush1.msra.mxu0 0.0
        %1220 = vmatprep.subr.mxu0 0.0
        %1221 = vmatpush1.msra.mxu0 0.0
        %1222 = vmatprep.subr.mxu0 0.0
        %1223 = vmatpush1.msra.mxu0 0.0
        %1224 = vmatprep.subr.mxu0 0.0
        %1225 = vmatpush1.msra.mxu0 0.0
        %1226 = vmatprep.subr.mxu0 0.0
        %1227 = vmatpush1.msra.mxu0 0.0
        %1228 = vmatprep.subr.mxu0 0.0
        %1229 = vmatpush1.msra.mxu0 0.0
        %1230 = vmatprep.subr.mxu0 0.0
        %1231 = vmatpush1.msra.mxu0 0.0
        %1232 = vmatprep.subr.mxu0 0.0
        %1233 = vmatpush1.msra.mxu0 0.0
        %1234 = vmatprep.subr.mxu0 0.0
        %1235 = vmatpush1.msra.mxu0 0.0
        %1236 = vmatprep.subr.mxu0 0.0
        %1237 = vmatpush1.msra.mxu0 0.0
        %1238 = vmatprep.subr.mxu0 0.0
        %1239 = vmatpush1.msra.mxu0 0.0
        %1240 = vmatprep.subr.mxu0 0.0
        %1241 = vmatpush1.msra.mxu0 0.0
        %1242 = vmatprep.subr.mxu0 0.0
        %1243 = vmatpush1.msra.mxu0 0.0
        %1244 = vmatprep.subr.mxu0 0.0
        %1245 = vmatpush1.msra.mxu0 0.0
        %1246 = vmatprep.subr.mxu0 %v1214
        %1247 = vmatpush1.msra.mxu0 %v1212
        %1248 = vmatprep.subr.mxu0 0.0
        %1249 = vmatpush2.msra.mxu0 0.0
        %1250 = vmatprep.subr.mxu0 0.0
        %1251 = vmatpush2.msra.mxu0 0.0
        %1252 = vmatprep.subr.mxu0 0.0
        %1253 = vmatpush2.msra.mxu0 0.0
        %1254 = vmatprep.subr.mxu0 0.0
        %1255 = vmatpush2.msra.mxu0 0.0
        %1256 = vmatprep.subr.mxu0 0.0
        %1257 = vmatpush2.msra.mxu0 0.0
        %1258 = vmatprep.subr.mxu0 0.0
        %1259 = vmatpush2.msra.mxu0 0.0
        %1260 = vmatprep.subr.mxu0 0.0
        %1261 = vmatpush2.msra.mxu0 0.0
        %1262 = vmatprep.subr.mxu0 0.0
        %1263 = vmatpush2.msra.mxu0 0.0
        %1264 = vmatprep.subr.mxu0 0.0
        %1265 = vmatpush2.msra.mxu0 0.0
        %1266 = vmatprep.subr.mxu0 0.0
        %1267 = vmatpush2.msra.mxu0 0.0
        %1268 = vmatprep.subr.mxu0 0.0
        %1269 = vmatpush2.msra.mxu0 0.0
        %1270 = vmatprep.subr.mxu0 0.0
        %1271 = vmatpush2.msra.mxu0 0.0
        %1272 = vmatprep.subr.mxu0 0.0
        %1273 = vmatpush2.msra.mxu0 0.0
        %1274 = vmatprep.subr.mxu0 0.0
        %1275 = vmatpush2.msra.mxu0 0.0
        %1276 = vmatprep.subr.mxu0 0.0
        %1277 = vmatpush2.msra.mxu0 0.0
        %1278 = vmatprep.subr.mxu0 0.0
        %1279 = vmatpush2.msra.mxu0 0.0
        %1280 = vmatprep.mubr.f32.mxu0 0.0
        %1281 = vmatmul.mubr.f32.gmra.mxu0 %v1210
        %v1282 = vpop.f32.mrf.mxu0
        %v1283 = vadd.f32 0.0, %v1282
        %v1284 = vpop.f32.mrf.mxu0
        %v1285 = vadd.f32 0.0, %v1284
        %1286 = vdwg.mxu0
        %1287 = vrot.lane.b32.xlu0 %v1193, 17
        %v1288 = vpop.permute.xlu0 %1287
        %1289 = vrot.lane.b32.xlu0 %v1200, 17
        %v1290 = vpop.permute.xlu0 %1289
        %1291 = vrot.lane.b32.xlu0 %v1194, 17
        %v1292 = vpop.permute.xlu0 %1291
        %v1293 = vsel %vm414, %v1288, %v1290
        %v1294 = vsel %vm414, %v1290, %v1292
        %v1296 = vsel %vm328, %v1195, 0
        %v1298 = vsel %vm332, %v1293, 0
        %v1300 = vsel %vm332, %v1294, 0
        %1302 = vmatprep.subr.mxu0 0.0
        %1303 = vmatpush1.msra.mxu0 0.0
        %1304 = vmatprep.subr.mxu0 0.0
        %1305 = vmatpush1.msra.mxu0 0.0
        %1306 = vmatprep.subr.mxu0 0.0
        %1307 = vmatpush1.msra.mxu0 0.0
        %1308 = vmatprep.subr.mxu0 0.0
        %1309 = vmatpush1.msra.mxu0 0.0
        %1310 = vmatprep.subr.mxu0 0.0
        %1311 = vmatpush1.msra.mxu0 0.0
        %1312 = vmatprep.subr.mxu0 0.0
        %1313 = vmatpush1.msra.mxu0 0.0
        %1314 = vmatprep.subr.mxu0 0.0
        %1315 = vmatpush1.msra.mxu0 0.0
        %1316 = vmatprep.subr.mxu0 0.0
        %1317 = vmatpush1.msra.mxu0 0.0
        %1318 = vmatprep.subr.mxu0 0.0
        %1319 = vmatpush1.msra.mxu0 0.0
        %1320 = vmatprep.subr.mxu0 0.0
        %1321 = vmatpush1.msra.mxu0 0.0
        %1322 = vmatprep.subr.mxu0 0.0
        %1323 = vmatpush1.msra.mxu0 0.0
        %1324 = vmatprep.subr.mxu0 0.0
        %1325 = vmatpush1.msra.mxu0 0.0
        %1326 = vmatprep.subr.mxu0 0.0
        %1327 = vmatpush1.msra.mxu0 0.0
        %1328 = vmatprep.subr.mxu0 0.0
        %1329 = vmatpush1.msra.mxu0 0.0
        %1330 = vmatprep.subr.mxu0 0.0
        %1331 = vmatpush1.msra.mxu0 0.0
        %1332 = vmatprep.subr.mxu0 %v1300
        %1333 = vmatpush1.msra.mxu0 %v1298
        %1334 = vmatprep.subr.mxu0 0.0
        %1335 = vmatpush2.msra.mxu0 0.0
        %1336 = vmatprep.subr.mxu0 0.0
        %1337 = vmatpush2.msra.mxu0 0.0
        %1338 = vmatprep.subr.mxu0 0.0
        %1339 = vmatpush2.msra.mxu0 0.0
        %1340 = vmatprep.subr.mxu0 0.0
        %1341 = vmatpush2.msra.mxu0 0.0
        %1342 = vmatprep.subr.mxu0 0.0
        %1343 = vmatpush2.msra.mxu0 0.0
        %1344 = vmatprep.subr.mxu0 0.0
        %1345 = vmatpush2.msra.mxu0 0.0
        %1346 = vmatprep.subr.mxu0 0.0
        %1347 = vmatpush2.msra.mxu0 0.0
        %1348 = vmatprep.subr.mxu0 0.0
        %1349 = vmatpush2.msra.mxu0 0.0
        %1350 = vmatprep.subr.mxu0 0.0
        %1351 = vmatpush2.msra.mxu0 0.0
        %1352 = vmatprep.subr.mxu0 0.0
        %1353 = vmatpush2.msra.mxu0 0.0
        %1354 = vmatprep.subr.mxu0 0.0
        %1355 = vmatpush2.msra.mxu0 0.0
        %1356 = vmatprep.subr.mxu0 0.0
        %1357 = vmatpush2.msra.mxu0 0.0
        %1358 = vmatprep.subr.mxu0 0.0
        %1359 = vmatpush2.msra.mxu0 0.0
        %1360 = vmatprep.subr.mxu0 0.0
        %1361 = vmatpush2.msra.mxu0 0.0
        %1362 = vmatprep.subr.mxu0 0.0
        %1363 = vmatpush2.msra.mxu0 0.0
        %1364 = vmatprep.subr.mxu0 0.0
        %1365 = vmatpush2.msra.mxu0 0.0
        %1366 = vmatprep.mubr.f32.mxu0 0.0
        %1367 = vmatmul.mubr.f32.gmra.mxu0 %v1296
        %v1368 = vpop.f32.mrf.mxu0
        %v1369 = vadd.f32 %v1283, %v1368
        %v1370 = vpop.f32.mrf.mxu0
        %v1371 = vadd.f32 %v1285, %v1370
        %1372 = vdwg.mxu0
        %v1373 = vld [vmem:[#allocation2 + $0x4] sm:$0xff]
        %v1374 = vld [vmem:[#allocation2 + $0xc] sm:$0xf]
        %s1375 = scalar_lea.vmem %s3, 24
        %v1376 = vld [vmem:[%s1375] sm:$0xf]
        %v1379 = vcombine.high %v1373, %v1373
        %1380 = vrot.lane.b32.xlu0 %v1373, 113
        %v1381 = vpop.permute.xlu0 %1380
        %1382 = vrot.lane.b32.xlu0 %v1379, 113
        %v1383 = vpop.permute.xlu0 %1382
        %1384 = vrot.lane.b32.xlu0 %v1374, 113
        %v1385 = vpop.permute.xlu0 %1384
        %v1386 = vsel %vm508, %v1381, %v1383
        %v1387 = vsel %vm508, %v1383, %v1385
        %v1389 = vsel %vm328, %v1376, 0
        %v1391 = vsel %vm332, %v1386, 0
        %v1393 = vsel %vm332, %v1387, 0
        %1395 = vmatprep.subr.mxu0 0.0
        %1396 = vmatpush1.msra.mxu0 0.0
        %1397 = vmatprep.subr.mxu0 0.0
        %1398 = vmatpush1.msra.mxu0 0.0
        %1399 = vmatprep.subr.mxu0 0.0
        %1400 = vmatpush1.msra.mxu0 0.0
        %1401 = vmatprep.subr.mxu0 0.0
        %1402 = vmatpush1.msra.mxu0 0.0
        %1403 = vmatprep.subr.mxu0 0.0
        %1404 = vmatpush1.msra.mxu0 0.0
        %1405 = vmatprep.subr.mxu0 0.0
        %1406 = vmatpush1.msra.mxu0 0.0
        %1407 = vmatprep.subr.mxu0 0.0
        %1408 = vmatpush1.msra.mxu0 0.0
        %1409 = vmatprep.subr.mxu0 0.0
        %1410 = vmatpush1.msra.mxu0 0.0
        %1411 = vmatprep.subr.mxu0 0.0
        %1412 = vmatpush1.msra.mxu0 0.0
        %1413 = vmatprep.subr.mxu0 0.0
        %1414 = vmatpush1.msra.mxu0 0.0
        %1415 = vmatprep.subr.mxu0 0.0
        %1416 = vmatpush1.msra.mxu0 0.0
        %1417 = vmatprep.subr.mxu0 0.0
        %1418 = vmatpush1.msra.mxu0 0.0
        %1419 = vmatprep.subr.mxu0 0.0
        %1420 = vmatpush1.msra.mxu0 0.0
        %1421 = vmatprep.subr.mxu0 0.0
        %1422 = vmatpush1.msra.mxu0 0.0
        %1423 = vmatprep.subr.mxu0 0.0
        %1424 = vmatpush1.msra.mxu0 0.0
        %1425 = vmatprep.subr.mxu0 %v1393
        %1426 = vmatpush1.msra.mxu0 %v1391
        %1427 = vmatprep.subr.mxu0 0.0
        %1428 = vmatpush2.msra.mxu0 0.0
        %1429 = vmatprep.subr.mxu0 0.0
        %1430 = vmatpush2.msra.mxu0 0.0
        %1431 = vmatprep.subr.mxu0 0.0
        %1432 = vmatpush2.msra.mxu0 0.0
        %1433 = vmatprep.subr.mxu0 0.0
        %1434 = vmatpush2.msra.mxu0 0.0
        %1435 = vmatprep.subr.mxu0 0.0
        %1436 = vmatpush2.msra.mxu0 0.0
        %1437 = vmatprep.subr.mxu0 0.0
        %1438 = vmatpush2.msra.mxu0 0.0
        %1439 = vmatprep.subr.mxu0 0.0
        %1440 = vmatpush2.msra.mxu0 0.0
        %1441 = vmatprep.subr.mxu0 0.0
        %1442 = vmatpush2.msra.mxu0 0.0
        %1443 = vmatprep.subr.mxu0 0.0
        %1444 = vmatpush2.msra.mxu0 0.0
        %1445 = vmatprep.subr.mxu0 0.0
        %1446 = vmatpush2.msra.mxu0 0.0
        %1447 = vmatprep.subr.mxu0 0.0
        %1448 = vmatpush2.msra.mxu0 0.0
        %1449 = vmatprep.subr.mxu0 0.0
        %1450 = vmatpush2.msra.mxu0 0.0
        %1451 = vmatprep.subr.mxu0 0.0
        %1452 = vmatpush2.msra.mxu0 0.0
        %1453 = vmatprep.subr.mxu0 0.0
        %1454 = vmatpush2.msra.mxu0 0.0
        %1455 = vmatprep.subr.mxu0 0.0
        %1456 = vmatpush2.msra.mxu0 0.0
        %1457 = vmatprep.subr.mxu0 0.0
        %1458 = vmatpush2.msra.mxu0 0.0
        %1459 = vmatprep.mubr.f32.mxu0 0.0
        %1460 = vmatmul.mubr.f32.gmra.mxu0 %v1389
        %v1461 = vpop.f32.mrf.mxu0
        %v1462 = vadd.f32 0.0, %v1461
        %v1463 = vpop.f32.mrf.mxu0
        %v1464 = vadd.f32 0.0, %v1463
        %1465 = vdwg.mxu0
        %v1466 = vadd.f32 %v1369, %v1462
        %v1467 = vadd.f32 %v1371, %v1464
        %v1468 = vld [vmem:[#allocation2] sm:$0xff]
        %v1469 = vld [vmem:[#allocation2 + $0x8] sm:$0xf]
        %s1470 = scalar_lea.vmem %s3, 4
        %v1471 = vld [vmem:[%s1470] sm:$0xf]
        %v1472 = vld [vmem:[#allocation2 + $0x4] sm:$0xff]
        %s1473 = scalar_lea.vmem %s3, 16
        %v1474 = vld [vmem:[%s1473] sm:$0xf]
        %v1476 = vcombine.high %v1472, %v1472
        %v1478 = vsel %vm328, %v1474, 0
        %v1480 = vsel %vm332, %v1472, 0
        %v1482 = vsel %vm332, %v1476, 0
        %1484 = vmatprep.subr.mxu0 0.0
        %1485 = vmatpush1.msra.mxu0 0.0
        %1486 = vmatprep.subr.mxu0 0.0
        %1487 = vmatpush1.msra.mxu0 0.0
        %1488 = vmatprep.subr.mxu0 0.0
        %1489 = vmatpush1.msra.mxu0 0.0
        %1490 = vmatprep.subr.mxu0 0.0
        %1491 = vmatpush1.msra.mxu0 0.0
        %1492 = vmatprep.subr.mxu0 0.0
        %1493 = vmatpush1.msra.mxu0 0.0
        %1494 = vmatprep.subr.mxu0 0.0
        %1495 = vmatpush1.msra.mxu0 0.0
        %1496 = vmatprep.subr.mxu0 0.0
        %1497 = vmatpush1.msra.mxu0 0.0
        %1498 = vmatprep.subr.mxu0 0.0
        %1499 = vmatpush1.msra.mxu0 0.0
        %1500 = vmatprep.subr.mxu0 0.0
        %1501 = vmatpush1.msra.mxu0 0.0
        %1502 = vmatprep.subr.mxu0 0.0
        %1503 = vmatpush1.msra.mxu0 0.0
        %1504 = vmatprep.subr.mxu0 0.0
        %1505 = vmatpush1.msra.mxu0 0.0
        %1506 = vmatprep.subr.mxu0 0.0
        %1507 = vmatpush1.msra.mxu0 0.0
        %1508 = vmatprep.subr.mxu0 0.0
        %1509 = vmatpush1.msra.mxu0 0.0
        %1510 = vmatprep.subr.mxu0 0.0
        %1511 = vmatpush1.msra.mxu0 0.0
        %1512 = vmatprep.subr.mxu0 0.0
        %1513 = vmatpush1.msra.mxu0 0.0
        %1514 = vmatprep.subr.mxu0 %v1482
        %1515 = vmatpush1.msra.mxu0 %v1480
        %1516 = vmatprep.subr.mxu0 0.0
        %1517 = vmatpush2.msra.mxu0 0.0
        %1518 = vmatprep.subr.mxu0 0.0
        %1519 = vmatpush2.msra.mxu0 0.0
        %1520 = vmatprep.subr.mxu0 0.0
        %1521 = vmatpush2.msra.mxu0 0.0
        %1522 = vmatprep.subr.mxu0 0.0
        %1523 = vmatpush2.msra.mxu0 0.0
        %1524 = vmatprep.subr.mxu0 0.0
        %1525 = vmatpush2.msra.mxu0 0.0
        %1526 = vmatprep.subr.mxu0 0.0
        %1527 = vmatpush2.msra.mxu0 0.0
        %1528 = vmatprep.subr.mxu0 0.0
        %1529 = vmatpush2.msra.mxu0 0.0
        %1530 = vmatprep.subr.mxu0 0.0
        %1531 = vmatpush2.msra.mxu0 0.0
        %1532 = vmatprep.subr.mxu0 0.0
        %1533 = vmatpush2.msra.mxu0 0.0
        %1534 = vmatprep.subr.mxu0 0.0
        %1535 = vmatpush2.msra.mxu0 0.0
        %1536 = vmatprep.subr.mxu0 0.0
        %1537 = vmatpush2.msra.mxu0 0.0
        %1538 = vmatprep.subr.mxu0 0.0
        %1539 = vmatpush2.msra.mxu0 0.0
        %1540 = vmatprep.subr.mxu0 0.0
        %1541 = vmatpush2.msra.mxu0 0.0
        %1542 = vmatprep.subr.mxu0 0.0
        %1543 = vmatpush2.msra.mxu0 0.0
        %1544 = vmatprep.subr.mxu0 0.0
        %1545 = vmatpush2.msra.mxu0 0.0
        %1546 = vmatprep.subr.mxu0 0.0
        %1547 = vmatpush2.msra.mxu0 0.0
        %1548 = vmatprep.mubr.f32.mxu0 0.0
        %1549 = vmatmul.mubr.f32.gmra.mxu0 %v1478
        %v1550 = vpop.f32.mrf.mxu0
        %v1551 = vadd.f32 0.0, %v1550
        %v1552 = vpop.f32.mrf.mxu0
        %v1553 = vadd.f32 0.0, %v1552
        %1554 = vdwg.mxu0
        %v1557 = vcombine.high %v1468, %v1468
        %1558 = vrot.lane.b32.xlu0 %v1468, 16
        %v1559 = vpop.permute.xlu0 %1558
        %1560 = vrot.lane.b32.xlu0 %v1557, 16
        %v1561 = vpop.permute.xlu0 %1560
        %1562 = vrot.lane.b32.xlu0 %v1469, 16
        %v1563 = vpop.permute.xlu0 %1562
        %v1564 = vsel %vm687, %v1559, %v1561
        %v1565 = vsel %vm687, %v1561, %v1563
        %v1567 = vsel %vm328, %v1471, 0
        %v1569 = vsel %vm332, %v1564, 0
        %v1571 = vsel %vm332, %v1565, 0
        %1573 = vmatprep.subr.mxu0 0.0
        %1574 = vmatpush1.msra.mxu0 0.0
        %1575 = vmatprep.subr.mxu0 0.0
        %1576 = vmatpush1.msra.mxu0 0.0
        %1577 = vmatprep.subr.mxu0 0.0
        %1578 = vmatpush1.msra.mxu0 0.0
        %1579 = vmatprep.subr.mxu0 0.0
        %1580 = vmatpush1.msra.mxu0 0.0
        %1581 = vmatprep.subr.mxu0 0.0
        %1582 = vmatpush1.msra.mxu0 0.0
        %1583 = vmatprep.subr.mxu0 0.0
        %1584 = vmatpush1.msra.mxu0 0.0
        %1585 = vmatprep.subr.mxu0 0.0
        %1586 = vmatpush1.msra.mxu0 0.0
        %1587 = vmatprep.subr.mxu0 0.0
        %1588 = vmatpush1.msra.mxu0 0.0
        %1589 = vmatprep.subr.mxu0 0.0
        %1590 = vmatpush1.msra.mxu0 0.0
        %1591 = vmatprep.subr.mxu0 0.0
        %1592 = vmatpush1.msra.mxu0 0.0
        %1593 = vmatprep.subr.mxu0 0.0
        %1594 = vmatpush1.msra.mxu0 0.0
        %1595 = vmatprep.subr.mxu0 0.0
        %1596 = vmatpush1.msra.mxu0 0.0
        %1597 = vmatprep.subr.mxu0 0.0
        %1598 = vmatpush1.msra.mxu0 0.0
        %1599 = vmatprep.subr.mxu0 0.0
        %1600 = vmatpush1.msra.mxu0 0.0
        %1601 = vmatprep.subr.mxu0 0.0
        %1602 = vmatpush1.msra.mxu0 0.0
        %1603 = vmatprep.subr.mxu0 %v1571
        %1604 = vmatpush1.msra.mxu0 %v1569
        %1605 = vmatprep.subr.mxu0 0.0
        %1606 = vmatpush2.msra.mxu0 0.0
        %1607 = vmatprep.subr.mxu0 0.0
        %1608 = vmatpush2.msra.mxu0 0.0
        %1609 = vmatprep.subr.mxu0 0.0
        %1610 = vmatpush2.msra.mxu0 0.0
        %1611 = vmatprep.subr.mxu0 0.0
        %1612 = vmatpush2.msra.mxu0 0.0
        %1613 = vmatprep.subr.mxu0 0.0
        %1614 = vmatpush2.msra.mxu0 0.0
        %1615 = vmatprep.subr.mxu0 0.0
        %1616 = vmatpush2.msra.mxu0 0.0
        %1617 = vmatprep.subr.mxu0 0.0
        %1618 = vmatpush2.msra.mxu0 0.0
        %1619 = vmatprep.subr.mxu0 0.0
        %1620 = vmatpush2.msra.mxu0 0.0
        %1621 = vmatprep.subr.mxu0 0.0
        %1622 = vmatpush2.msra.mxu0 0.0
        %1623 = vmatprep.subr.mxu0 0.0
        %1624 = vmatpush2.msra.mxu0 0.0
        %1625 = vmatprep.subr.mxu0 0.0
        %1626 = vmatpush2.msra.mxu0 0.0
        %1627 = vmatprep.subr.mxu0 0.0
        %1628 = vmatpush2.msra.mxu0 0.0
        %1629 = vmatprep.subr.mxu0 0.0
        %1630 = vmatpush2.msra.mxu0 0.0
        %1631 = vmatprep.subr.mxu0 0.0
        %1632 = vmatpush2.msra.mxu0 0.0
        %1633 = vmatprep.subr.mxu0 0.0
        %1634 = vmatpush2.msra.mxu0 0.0
        %1635 = vmatprep.subr.mxu0 0.0
        %1636 = vmatpush2.msra.mxu0 0.0
        %1637 = vmatprep.mubr.f32.mxu0 0.0
        %1638 = vmatmul.mubr.f32.gmra.mxu0 %v1567
        %v1639 = vpop.f32.mrf.mxu0
        %v1640 = vadd.f32 %v1551, %v1639
        %v1641 = vpop.f32.mrf.mxu0
        %v1642 = vadd.f32 %v1553, %v1641
        %1643 = vdwg.mxu0
        %v1644 = vld [vmem:[#allocation2 + $0x4] sm:$0xff]
        %v1645 = vld [vmem:[#allocation2 + $0xc] sm:$0xf]
        %s1646 = scalar_lea.vmem %s3, 28
        %v1647 = vld [vmem:[%s1646] sm:$0xf]
        %v1650 = vcombine.high %v1644, %v1644
        %1651 = vrot.lane.b32.xlu0 %v1644, 112
        %v1652 = vpop.permute.xlu0 %1651
        %1653 = vrot.lane.b32.xlu0 %v1650, 112
        %v1654 = vpop.permute.xlu0 %1653
        %1655 = vrot.lane.b32.xlu0 %v1645, 112
        %v1656 = vpop.permute.xlu0 %1655
        %v1657 = vsel %vm781, %v1652, %v1654
        %v1658 = vsel %vm781, %v1654, %v1656
        %v1660 = vsel %vm328, %v1647, 0
        %v1662 = vsel %vm332, %v1657, 0
        %v1664 = vsel %vm332, %v1658, 0
        %1666 = vmatprep.subr.mxu0 0.0
        %1667 = vmatpush1.msra.mxu0 0.0
        %1668 = vmatprep.subr.mxu0 0.0
        %1669 = vmatpush1.msra.mxu0 0.0
        %1670 = vmatprep.subr.mxu0 0.0
        %1671 = vmatpush1.msra.mxu0 0.0
        %1672 = vmatprep.subr.mxu0 0.0
        %1673 = vmatpush1.msra.mxu0 0.0
        %1674 = vmatprep.subr.mxu0 0.0
        %1675 = vmatpush1.msra.mxu0 0.0
        %1676 = vmatprep.subr.mxu0 0.0
        %1677 = vmatpush1.msra.mxu0 0.0
        %1678 = vmatprep.subr.mxu0 0.0
        %1679 = vmatpush1.msra.mxu0 0.0
        %1680 = vmatprep.subr.mxu0 0.0
        %1681 = vmatpush1.msra.mxu0 0.0
        %1682 = vmatprep.subr.mxu0 0.0
        %1683 = vmatpush1.msra.mxu0 0.0
        %1684 = vmatprep.subr.mxu0 0.0
        %1685 = vmatpush1.msra.mxu0 0.0
        %1686 = vmatprep.subr.mxu0 0.0
        %1687 = vmatpush1.msra.mxu0 0.0
        %1688 = vmatprep.subr.mxu0 0.0
        %1689 = vmatpush1.msra.mxu0 0.0
        %1690 = vmatprep.subr.mxu0 0.0
        %1691 = vmatpush1.msra.mxu0 0.0
        %1692 = vmatprep.subr.mxu0 0.0
        %1693 = vmatpush1.msra.mxu0 0.0
        %1694 = vmatprep.subr.mxu0 0.0
        %1695 = vmatpush1.msra.mxu0 0.0
        %1696 = vmatprep.subr.mxu0 %v1664
        %1697 = vmatpush1.msra.mxu0 %v1662
        %1698 = vmatprep.subr.mxu0 0.0
        %1699 = vmatpush2.msra.mxu0 0.0
        %1700 = vmatprep.subr.mxu0 0.0
        %1701 = vmatpush2.msra.mxu0 0.0
        %1702 = vmatprep.subr.mxu0 0.0
        %1703 = vmatpush2.msra.mxu0 0.0
        %1704 = vmatprep.subr.mxu0 0.0
        %1705 = vmatpush2.msra.mxu0 0.0
        %1706 = vmatprep.subr.mxu0 0.0
        %1707 = vmatpush2.msra.mxu0 0.0
        %1708 = vmatprep.subr.mxu0 0.0
        %1709 = vmatpush2.msra.mxu0 0.0
        %1710 = vmatprep.subr.mxu0 0.0
        %1711 = vmatpush2.msra.mxu0 0.0
        %1712 = vmatprep.subr.mxu0 0.0
        %1713 = vmatpush2.msra.mxu0 0.0
        %1714 = vmatprep.subr.mxu0 0.0
        %1715 = vmatpush2.msra.mxu0 0.0
        %1716 = vmatprep.subr.mxu0 0.0
        %1717 = vmatpush2.msra.mxu0 0.0
        %1718 = vmatprep.subr.mxu0 0.0
        %1719 = vmatpush2.msra.mxu0 0.0
        %1720 = vmatprep.subr.mxu0 0.0
        %1721 = vmatpush2.msra.mxu0 0.0
        %1722 = vmatprep.subr.mxu0 0.0
        %1723 = vmatpush2.msra.mxu0 0.0
        %1724 = vmatprep.subr.mxu0 0.0
        %1725 = vmatpush2.msra.mxu0 0.0
        %1726 = vmatprep.subr.mxu0 0.0
        %1727 = vmatpush2.msra.mxu0 0.0
        %1728 = vmatprep.subr.mxu0 0.0
        %1729 = vmatpush2.msra.mxu0 0.0
        %1730 = vmatprep.mubr.f32.mxu0 0.0
        %1731 = vmatmul.mubr.f32.gmra.mxu0 %v1660
        %v1732 = vpop.f32.mrf.mxu0
        %v1733 = vadd.f32 0.0, %v1732
        %v1734 = vpop.f32.mrf.mxu0
        %v1735 = vadd.f32 0.0, %v1734
        %1736 = vdwg.mxu0
        %v1737 = vadd.f32 %v1640, %v1733
        %v1738 = vadd.f32 %v1642, %v1735
        %v1739 = vld [vmem:[#allocation2] sm:$0xff]
        %v1740 = vld [vmem:[#allocation2 + $0x8] sm:$0xf]
        %s1741 = scalar_lea.vmem %s3, 8
        %v1742 = vld [vmem:[%s1741] sm:$0xf]
        %v1743 = vld [vmem:[#allocation2 + $0x4] sm:$0xff]
        %v1744 = vld [vmem:[#allocation2 + $0xc] sm:$0xf]
        %s1745 = scalar_lea.vmem %s3, 20
        %v1746 = vld [vmem:[%s1745] sm:$0xf]
        %v1749 = vcombine.high %v1743, %v1743
        %1750 = vrot.lane.b32.xlu0 %v1743, 127
        %v1751 = vpop.permute.xlu0 %1750
        %1752 = vrot.lane.b32.xlu0 %v1749, 127
        %v1753 = vpop.permute.xlu0 %1752
        %1754 = vrot.lane.b32.xlu0 %v1744, 127
        %v1755 = vpop.permute.xlu0 %1754
        %v1756 = vsel %vm881, %v1751, %v1753
        %v1757 = vsel %vm881, %v1753, %v1755
        %v1759 = vsel %vm328, %v1746, 0
        %v1761 = vsel %vm332, %v1756, 0
        %v1763 = vsel %vm332, %v1757, 0
        %1765 = vmatprep.subr.mxu0 0.0
        %1766 = vmatpush1.msra.mxu0 0.0
        %1767 = vmatprep.subr.mxu0 0.0
        %1768 = vmatpush1.msra.mxu0 0.0
        %1769 = vmatprep.subr.mxu0 0.0
        %1770 = vmatpush1.msra.mxu0 0.0
        %1771 = vmatprep.subr.mxu0 0.0
        %1772 = vmatpush1.msra.mxu0 0.0
        %1773 = vmatprep.subr.mxu0 0.0
        %1774 = vmatpush1.msra.mxu0 0.0
        %1775 = vmatprep.subr.mxu0 0.0
        %1776 = vmatpush1.msra.mxu0 0.0
        %1777 = vmatprep.subr.mxu0 0.0
        %1778 = vmatpush1.msra.mxu0 0.0
        %1779 = vmatprep.subr.mxu0 0.0
        %1780 = vmatpush1.msra.mxu0 0.0
        %1781 = vmatprep.subr.mxu0 0.0
        %1782 = vmatpush1.msra.mxu0 0.0
        %1783 = vmatprep.subr.mxu0 0.0
        %1784 = vmatpush1.msra.mxu0 0.0
        %1785 = vmatprep.subr.mxu0 0.0
        %1786 = vmatpush1.msra.mxu0 0.0
        %1787 = vmatprep.subr.mxu0 0.0
        %1788 = vmatpush1.msra.mxu0 0.0
        %1789 = vmatprep.subr.mxu0 0.0
        %1790 = vmatpush1.msra.mxu0 0.0
        %1791 = vmatprep.subr.mxu0 0.0
        %1792 = vmatpush1.msra.mxu0 0.0
        %1793 = vmatprep.subr.mxu0 0.0
        %1794 = vmatpush1.msra.mxu0 0.0
        %1795 = vmatprep.subr.mxu0 %v1763
        %1796 = vmatpush1.msra.mxu0 %v1761
        %1797 = vmatprep.subr.mxu0 0.0
        %1798 = vmatpush2.msra.mxu0 0.0
        %1799 = vmatprep.subr.mxu0 0.0
        %1800 = vmatpush2.msra.mxu0 0.0
        %1801 = vmatprep.subr.mxu0 0.0
        %1802 = vmatpush2.msra.mxu0 0.0
        %1803 = vmatprep.subr.mxu0 0.0
        %1804 = vmatpush2.msra.mxu0 0.0
        %1805 = vmatprep.subr.mxu0 0.0
        %1806 = vmatpush2.msra.mxu0 0.0
        %1807 = vmatprep.subr.mxu0 0.0
        %1808 = vmatpush2.msra.mxu0 0.0
        %1809 = vmatprep.subr.mxu0 0.0
        %1810 = vmatpush2.msra.mxu0 0.0
        %1811 = vmatprep.subr.mxu0 0.0
        %1812 = vmatpush2.msra.mxu0 0.0
        %1813 = vmatprep.subr.mxu0 0.0
        %1814 = vmatpush2.msra.mxu0 0.0
        %1815 = vmatprep.subr.mxu0 0.0
        %1816 = vmatpush2.msra.mxu0 0.0
        %1817 = vmatprep.subr.mxu0 0.0
        %1818 = vmatpush2.msra.mxu0 0.0
        %1819 = vmatprep.subr.mxu0 0.0
        %1820 = vmatpush2.msra.mxu0 0.0
        %1821 = vmatprep.subr.mxu0 0.0
        %1822 = vmatpush2.msra.mxu0 0.0
        %1823 = vmatprep.subr.mxu0 0.0
        %1824 = vmatpush2.msra.mxu0 0.0
        %1825 = vmatprep.subr.mxu0 0.0
        %1826 = vmatpush2.msra.mxu0 0.0
        %1827 = vmatprep.subr.mxu0 0.0
        %1828 = vmatpush2.msra.mxu0 0.0
        %1829 = vmatprep.mubr.f32.mxu0 0.0
        %1830 = vmatmul.mubr.f32.gmra.mxu0 %v1759
        %v1831 = vpop.f32.mrf.mxu0
        %v1832 = vadd.f32 0.0, %v1831
        %v1833 = vpop.f32.mrf.mxu0
        %v1834 = vadd.f32 0.0, %v1833
        %1835 = vdwg.mxu0
        %v1838 = vcombine.high %v1739, %v1739
        %1839 = vrot.lane.b32.xlu0 %v1739, 15
        %v1840 = vpop.permute.xlu0 %1839
        %1841 = vrot.lane.b32.xlu0 %v1838, 15
        %v1842 = vpop.permute.xlu0 %1841
        %1843 = vrot.lane.b32.xlu0 %v1740, 15
        %v1844 = vpop.permute.xlu0 %1843
        %v1845 = vsel %vm971, %v1840, %v1842
        %v1846 = vsel %vm971, %v1842, %v1844
        %v1848 = vsel %vm328, %v1742, 0
        %v1850 = vsel %vm332, %v1845, 0
        %v1852 = vsel %vm332, %v1846, 0
        %1854 = vmatprep.subr.mxu0 0.0
        %1855 = vmatpush1.msra.mxu0 0.0
        %1856 = vmatprep.subr.mxu0 0.0
        %1857 = vmatpush1.msra.mxu0 0.0
        %1858 = vmatprep.subr.mxu0 0.0
        %1859 = vmatpush1.msra.mxu0 0.0
        %1860 = vmatprep.subr.mxu0 0.0
        %1861 = vmatpush1.msra.mxu0 0.0
        %1862 = vmatprep.subr.mxu0 0.0
        %1863 = vmatpush1.msra.mxu0 0.0
        %1864 = vmatprep.subr.mxu0 0.0
        %1865 = vmatpush1.msra.mxu0 0.0
        %1866 = vmatprep.subr.mxu0 0.0
        %1867 = vmatpush1.msra.mxu0 0.0
        %1868 = vmatprep.subr.mxu0 0.0
        %1869 = vmatpush1.msra.mxu0 0.0
        %1870 = vmatprep.subr.mxu0 0.0
        %1871 = vmatpush1.msra.mxu0 0.0
        %1872 = vmatprep.subr.mxu0 0.0
        %1873 = vmatpush1.msra.mxu0 0.0
        %1874 = vmatprep.subr.mxu0 0.0
        %1875 = vmatpush1.msra.mxu0 0.0
        %1876 = vmatprep.subr.mxu0 0.0
        %1877 = vmatpush1.msra.mxu0 0.0
        %1878 = vmatprep.subr.mxu0 0.0
        %1879 = vmatpush1.msra.mxu0 0.0
        %1880 = vmatprep.subr.mxu0 0.0
        %1881 = vmatpush1.msra.mxu0 0.0
        %1882 = vmatprep.subr.mxu0 0.0
        %1883 = vmatpush1.msra.mxu0 0.0
        %1884 = vmatprep.subr.mxu0 %v1852
        %1885 = vmatpush1.msra.mxu0 %v1850
        %1886 = vmatprep.subr.mxu0 0.0
        %1887 = vmatpush2.msra.mxu0 0.0
        %1888 = vmatprep.subr.mxu0 0.0
        %1889 = vmatpush2.msra.mxu0 0.0
        %1890 = vmatprep.subr.mxu0 0.0
        %1891 = vmatpush2.msra.mxu0 0.0
        %1892 = vmatprep.subr.mxu0 0.0
        %1893 = vmatpush2.msra.mxu0 0.0
        %1894 = vmatprep.subr.mxu0 0.0
        %1895 = vmatpush2.msra.mxu0 0.0
        %1896 = vmatprep.subr.mxu0 0.0
        %1897 = vmatpush2.msra.mxu0 0.0
        %1898 = vmatprep.subr.mxu0 0.0
        %1899 = vmatpush2.msra.mxu0 0.0
        %1900 = vmatprep.subr.mxu0 0.0
        %1901 = vmatpush2.msra.mxu0 0.0
        %1902 = vmatprep.subr.mxu0 0.0
        %1903 = vmatpush2.msra.mxu0 0.0
        %1904 = vmatprep.subr.mxu0 0.0
        %1905 = vmatpush2.msra.mxu0 0.0
        %1906 = vmatprep.subr.mxu0 0.0
        %1907 = vmatpush2.msra.mxu0 0.0
        %1908 = vmatprep.subr.mxu0 0.0
        %1909 = vmatpush2.msra.mxu0 0.0
        %1910 = vmatprep.subr.mxu0 0.0
        %1911 = vmatpush2.msra.mxu0 0.0
        %1912 = vmatprep.subr.mxu0 0.0
        %1913 = vmatpush2.msra.mxu0 0.0
        %1914 = vmatprep.subr.mxu0 0.0
        %1915 = vmatpush2.msra.mxu0 0.0
        %1916 = vmatprep.subr.mxu0 0.0
        %1917 = vmatpush2.msra.mxu0 0.0
        %1918 = vmatprep.mubr.f32.mxu0 0.0
        %1919 = vmatmul.mubr.f32.gmra.mxu0 %v1848
        %v1920 = vpop.f32.mrf.mxu0
        %v1921 = vadd.f32 %v1832, %v1920
        %v1922 = vpop.f32.mrf.mxu0
        %v1923 = vadd.f32 %v1834, %v1922
        %1924 = vdwg.mxu0
        %v1925 = vld [vmem:[#allocation2 + $0x4] sm:$0xff]
        %v1926 = vld [vmem:[#allocation2 + $0xc] sm:$0xf]
        %s1927 = scalar_lea.vmem %s3, 32
        %v1928 = vld [vmem:[%s1927] sm:$0xf]
        %v1931 = vcombine.high %v1925, %v1925
        %1932 = vrot.lane.b32.xlu0 %v1925, 111
        %v1933 = vpop.permute.xlu0 %1932
        %1934 = vrot.lane.b32.xlu0 %v1931, 111
        %v1935 = vpop.permute.xlu0 %1934
        %1936 = vrot.lane.b32.xlu0 %v1926, 111
        %v1937 = vpop.permute.xlu0 %1936
        %v1938 = vsel %vm1065, %v1933, %v1935
        %v1939 = vsel %vm1065, %v1935, %v1937
        %v1941 = vsel %vm328, %v1928, 0
        %v1943 = vsel %vm332, %v1938, 0
        %v1945 = vsel %vm332, %v1939, 0
        %1947 = vmatprep.subr.mxu0 0.0
        %1948 = vmatpush1.msra.mxu0 0.0
        %1949 = vmatprep.subr.mxu0 0.0
        %1950 = vmatpush1.msra.mxu0 0.0
        %1951 = vmatprep.subr.mxu0 0.0
        %1952 = vmatpush1.msra.mxu0 0.0
        %1953 = vmatprep.subr.mxu0 0.0
        %1954 = vmatpush1.msra.mxu0 0.0
        %1955 = vmatprep.subr.mxu0 0.0
        %1956 = vmatpush1.msra.mxu0 0.0
        %1957 = vmatprep.subr.mxu0 0.0
        %1958 = vmatpush1.msra.mxu0 0.0
        %1959 = vmatprep.subr.mxu0 0.0
        %1960 = vmatpush1.msra.mxu0 0.0
        %1961 = vmatprep.subr.mxu0 0.0
        %1962 = vmatpush1.msra.mxu0 0.0
        %1963 = vmatprep.subr.mxu0 0.0
        %1964 = vmatpush1.msra.mxu0 0.0
        %1965 = vmatprep.subr.mxu0 0.0
        %1966 = vmatpush1.msra.mxu0 0.0
        %1967 = vmatprep.subr.mxu0 0.0
        %1968 = vmatpush1.msra.mxu0 0.0
        %1969 = vmatprep.subr.mxu0 0.0
        %1970 = vmatpush1.msra.mxu0 0.0
        %1971 = vmatprep.subr.mxu0 0.0
        %1972 = vmatpush1.msra.mxu0 0.0
        %1973 = vmatprep.subr.mxu0 0.0
        %1974 = vmatpush1.msra.mxu0 0.0
        %1975 = vmatprep.subr.mxu0 0.0
        %1976 = vmatpush1.msra.mxu0 0.0
        %1977 = vmatprep.subr.mxu0 %v1945
        %1978 = vmatpush1.msra.mxu0 %v1943
        %1979 = vmatprep.subr.mxu0 0.0
        %1980 = vmatpush2.msra.mxu0 0.0
        %1981 = vmatprep.subr.mxu0 0.0
        %1982 = vmatpush2.msra.mxu0 0.0
        %1983 = vmatprep.subr.mxu0 0.0
        %1984 = vmatpush2.msra.mxu0 0.0
        %1985 = vmatprep.subr.mxu0 0.0
        %1986 = vmatpush2.msra.mxu0 0.0
        %1987 = vmatprep.subr.mxu0 0.0
        %1988 = vmatpush2.msra.mxu0 0.0
        %1989 = vmatprep.subr.mxu0 0.0
        %1990 = vmatpush2.msra.mxu0 0.0
        %1991 = vmatprep.subr.mxu0 0.0
        %1992 = vmatpush2.msra.mxu0 0.0
        %1993 = vmatprep.subr.mxu0 0.0
        %1994 = vmatpush2.msra.mxu0 0.0
        %1995 = vmatprep.subr.mxu0 0.0
        %1996 = vmatpush2.msra.mxu0 0.0
        %1997 = vmatprep.subr.mxu0 0.0
        %1998 = vmatpush2.msra.mxu0 0.0
        %1999 = vmatprep.subr.mxu0 0.0
        %2000 = vmatpush2.msra.mxu0 0.0
        %2001 = vmatprep.subr.mxu0 0.0
        %2002 = vmatpush2.msra.mxu0 0.0
        %2003 = vmatprep.subr.mxu0 0.0
        %2004 = vmatpush2.msra.mxu0 0.0
        %2005 = vmatprep.subr.mxu0 0.0
        %2006 = vmatpush2.msra.mxu0 0.0
        %2007 = vmatprep.subr.mxu0 0.0
        %2008 = vmatpush2.msra.mxu0 0.0
        %2009 = vmatprep.subr.mxu0 0.0
        %2010 = vmatpush2.msra.mxu0 0.0
        %2011 = vmatprep.mubr.f32.mxu0 0.0
        %2012 = vmatmul.mubr.f32.gmra.mxu0 %v1941
        %v2013 = vpop.f32.mrf.mxu0
        %v2014 = vadd.f32 0.0, %v2013
        %v2015 = vpop.f32.mrf.mxu0
        %v2016 = vadd.f32 0.0, %v2015
        %2017 = vdwg.mxu0
        %v2018 = vadd.f32 %v1921, %v2014
        %v2019 = vadd.f32 %v1923, %v2016
        %v2020 = vmul.f32 %v1466, %v1152
        %v2021 = vmul.f32 %v1467, %v1156
        %v2022 = vadd.f32 %v2020, %v1737
        %v2023 = vadd.f32 %v2021, %v1738
        %v2024 = vmul.f32 %v2018, %v1167
        %v2025 = vmul.f32 %v2019, %v1171
        %v2026 = vadd.f32 %v2022, %v2024
        %v2027 = vadd.f32 %v2023, %v2025
        %v2028 = vld [vmem:[%s4] sm:$0xf]
        %2030 = vset.pattern.permute.xlu0 0
        %2031 = vperm.xlu0 %2030, %v2028
        %v2032 = vpop.permute.xlu0 %2031
        %v2034 = vadd.f32 %v2026, %v2032
        %v2035 = vadd.f32 %v2027, %v2032
        %v2036 = vmax.f32 %v2034, 0.0
        %v2037 = vmax.f32 %v2035, 0.0
        %v2038 = vld [vmem:[%s5] sm:$0xf]
        %v2039 = vld [vmem:[%s6] sm:$0xf]
        %2041 = vset.pattern.permute.xlu0 0
        %2042 = vperm.xlu0 %2041, %v2039
        %v2043 = vpop.permute.xlu0 %2042
        %v2046 = vsel %vm328, %v2038, 0
        %v2049 = vsel %vm332, %v2036, 0
        %v2052 = vsel %vm332, %v2037, 0
        %2054 = vmatprep.subr.mxu0 0.0
        %2055 = vmatpush1.msra.mxu0 0.0
        %2056 = vmatprep.subr.mxu0 0.0
        %2057 = vmatpush1.msra.mxu0 0.0
        %2058 = vmatprep.subr.mxu0 0.0
        %2059 = vmatpush1.msra.mxu0 0.0
        %2060 = vmatprep.subr.mxu0 0.0
        %2061 = vmatpush1.msra.mxu0 0.0
        %2062 = vmatprep.subr.mxu0 0.0
        %2063 = vmatpush1.msra.mxu0 0.0
        %2064 = vmatprep.subr.mxu0 0.0
        %2065 = vmatpush1.msra.mxu0 0.0
        %2066 = vmatprep.subr.mxu0 0.0
        %2067 = vmatpush1.msra.mxu0 0.0
        %2068 = vmatprep.subr.mxu0 0.0
        %2069 = vmatpush1.msra.mxu0 0.0
        %2070 = vmatprep.subr.mxu0 0.0
        %2071 = vmatpush1.msra.mxu0 0.0
        %2072 = vmatprep.subr.mxu0 0.0
        %2073 = vmatpush1.msra.mxu0 0.0
        %2074 = vmatprep.subr.mxu0 0.0
        %2075 = vmatpush1.msra.mxu0 0.0
        %2076 = vmatprep.subr.mxu0 0.0
        %2077 = vmatpush1.msra.mxu0 0.0
        %2078 = vmatprep.subr.mxu0 0.0
        %2079 = vmatpush1.msra.mxu0 0.0
        %2080 = vmatprep.subr.mxu0 0.0
        %2081 = vmatpush1.msra.mxu0 0.0
        %2082 = vmatprep.subr.mxu0 0.0
        %2083 = vmatpush1.msra.mxu0 0.0
        %2084 = vmatprep.subr.mxu0 %v2052
        %2085 = vmatpush1.msra.mxu0 %v2049
        %2086 = vmatprep.subr.mxu0 0.0
        %2087 = vmatpush2.msra.mxu0 0.0
        %2088 = vmatprep.subr.mxu0 0.0
        %2089 = vmatpush2.msra.mxu0 0.0
        %2090 = vmatprep.subr.mxu0 0.0
        %2091 = vmatpush2.msra.mxu0 0.0
        %2092 = vmatprep.subr.mxu0 0.0
        %2093 = vmatpush2.msra.mxu0 0.0
        %2094 = vmatprep.subr.mxu0 0.0
        %2095 = vmatpush2.msra.mxu0 0.0
        %2096 = vmatprep.subr.mxu0 0.0
        %2097 = vmatpush2.msra.mxu0 0.0
        %2098 = vmatprep.subr.mxu0 0.0
        %2099 = vmatpush2.msra.mxu0 0.0
        %2100 = vmatprep.subr.mxu0 0.0
        %2101 = vmatpush2.msra.mxu0 0.0
        %2102 = vmatprep.subr.mxu0 0.0
        %2103 = vmatpush2.msra.mxu0 0.0
        %2104 = vmatprep.subr.mxu0 0.0
        %2105 = vmatpush2.msra.mxu0 0.0
        %2106 = vmatprep.subr.mxu0 0.0
        %2107 = vmatpush2.msra.mxu0 0.0
        %2108 = vmatprep.subr.mxu0 0.0
        %2109 = vmatpush2.msra.mxu0 0.0
        %2110 = vmatprep.subr.mxu0 0.0
        %2111 = vmatpush2.msra.mxu0 0.0
        %2112 = vmatprep.subr.mxu0 0.0
        %2113 = vmatpush2.msra.mxu0 0.0
        %2114 = vmatprep.subr.mxu0 0.0
        %2115 = vmatpush2.msra.mxu0 0.0
        %2116 = vmatprep.subr.mxu0 0.0
        %2117 = vmatpush2.msra.mxu0 0.0
        %2118 = vmatprep.mubr.f32.mxu0 0.0
        %2119 = vmatmul.mubr.f32.gmra.mxu0 %v2046
        %v2120 = vpop.f32.mrf.mxu0
        %v2121 = vadd.f32 %v2043, %v2120
        %v2122 = vpop.f32.mrf.mxu0
        %v2123 = vadd.f32 %v2043, %v2122
        %2124 = vdwg.mxu0
        %v2126 = vcombine.high %v309, %v309
        %v2128 = vadd.f32 %v2121, %v309
        %v2129 = vadd.f32 %v2123, %v2126
        %v2130 = vmax.f32 %v2128, 0.0
        %v2131 = vmax.f32 %v2129, 0.0
        %v2134 = vcombine.low %v2130, %v2131
        %2136 = vst [vmem:[%s298] sm:$0xff] %v2134
        %s2137 = sand.u32 %s203, 1
        %s2138 = scalar_lea.sflag [#allocation4], %s2137
        %s2139 = sand.u32 %s203, 1
        %s2140 = smul.addr %s2139, 8
        %s2141 = scalar_lea.vmem [#allocation3], %s2140
        // Predicated region
        $region53: #{tpu_custom_call.1} parent=51 // pred_check
          %p2142 = pneg %p213
        $region54: #{tpu_custom_call.1} parent=51 // pred_check_branch
          %2144 = sbr.rel (%p2142) target = $region56
        $region55: #{tpu_custom_call.1} parent=51 // pred_region
          %s2146 = ssub.s32 128, 128
          %2147 = vsyncadd %s2138, %s2146
          %s2148 = smul.addr %s22, 2
          %s2149 = smul.addr %s2148, 64
          %s2150 = scalar_lea.hbm %s8, %s2149
          %s2152 = sshll.u32 %s2141, 4
          %s2153 = int_to_ptr.vmem [resolvable:$true] %s2152
          %2155 = dma.vmem_to_hbm [thread:$0]  %s2153, 128, %s2150, %s2138
        $region56: #{tpu_custom_call.1} parent=51 // pred_fallthru
          _
      $region52: #{tpu_custom_call.1} parent=5 // pred_fallthru
        _
      %p2156 = scmp.le.s32.totalorder 2, %s17
      // Predicated region
      $region57: #{tpu_custom_call.1} parent=5 // pred_check
        %p2157 = pneg %p2156
      $region58: #{tpu_custom_call.1} parent=5 // pred_check_branch
        %2159 = sbr.rel (%p2157) target = $region60
      $region59: #{tpu_custom_call.1} parent=5 // pred_region
        %s2160 = ssub.s32 %s17, 2
        // Predicated region
        $region61: #{tpu_custom_call.1} parent=59 // pred_check
          %p2161 = pneg %p219
        $region62: #{tpu_custom_call.1} parent=59 // pred_check_branch
          %2163 = sbr.rel (%p2161) target = $region64
        $region63: #{tpu_custom_call.1} parent=59 // pred_region
          %s2164 = sand.u32 %s204, 1
          %s2165 = scalar_lea.sflag [#allocation4], %s2164
          %s2166 = sand.u32 %s204, 1
          %s2167 = smul.addr %s2166, 8
          %s2168 = scalar_lea.vmem [#allocation3], %s2167
          %2169 = dma.done %s2165, 128
        $region64: #{tpu_custom_call.1} parent=59 // pred_fallthru
          _
      $region60: #{tpu_custom_call.1} parent=5 // pred_fallthru
        _
    $region6: #{tpu_custom_call.1} parent=1 // loop_footer
      %s21 = sadd.s32 1, %s17
    $region7: #{tpu_custom_call.1} parent=1 // loop_footer_branch
      %16 = sbr.rel target = $region3
    $region8: #{tpu_custom_call.1} parent=1 // loop_exit
      _
    %2170 = vsyncpa [#allocation4], 1
    %s2171 = scalar_lea.sflag [#allocation4], 1
    %2172 = vsyncpa %s2171, 1

</llo_original>
